<compile_context>
chip_gen: v6e
topology: v6e:2x2x1
jax: 0.10.0
libtpu: 0.0.40
codegen_flags: <defaults>
</compile_context>

<pallas_src>
import jax
import jax.numpy as jnp
from jax.experimental import pallas as pl
from jax.experimental.pallas import tpu as pltpu

TILE_B = 256          # MXU-aligned batch tile (256 on v6e/v7x; also fine on v5e)
K1 = 896              # 784 padded up to a multiple of 128
H1, H2 = 256, 128     # fc1 / fc2 widths (already 128-aligned)
H3 = 128              # fc3 out / fc4 in padded 64 -> 128
OUT = 128             # fc4 out padded 10 -> 128 (sliced back to 10 in wrapper)


def _mlp_kernel(x_ref, w1_ref, b1_ref, w2_ref, b2_ref,
                w3_ref, b3_ref, w4_ref, b4_ref, o_ref):
    # fc1 + bias + relu (bf16 MXU inputs, f32 accumulate; bias+relu fused on VPU)
    h = jnp.dot(x_ref[...], w1_ref[...], preferred_element_type=jnp.float32)
    h = jnp.maximum(h + b1_ref[...], 0.0)
    # dropout(0.1): identity at inference time
    # fc2 + bias + relu
    h = jnp.dot(h.astype(jnp.bfloat16), w2_ref[...], preferred_element_type=jnp.float32)
    h = jnp.maximum(h + b2_ref[...], 0.0)
    # dropout(0.1): identity at inference time
    # fc3 + bias + relu (padded 64 -> 128 cols; pad cols are exactly zero)
    h = jnp.dot(h.astype(jnp.bfloat16), w3_ref[...], preferred_element_type=jnp.float32)
    h = jnp.maximum(h + b3_ref[...], 0.0)
    # fc4 logits (padded 10 -> 128 cols)
    h = jnp.dot(h.astype(jnp.bfloat16), w4_ref[...], preferred_element_type=jnp.float32)
    o_ref[...] = (h + b4_ref[...]).astype(o_ref.dtype)


def digit_identifier_forward(x, params, *, tile_b=TILE_B):
    """x: (B, 1, 28, 28) or (B, 784) float32. Returns (B, 10) float32 logits."""
    x2d = x.reshape(-1, 28 * 28).astype(jnp.float32)
    B = x2d.shape[0]
    (w1, b1), (w2, b2), (w3, b3), (w4, b4) = params

    # --- pad to lane-dense, MXU-aligned shapes; cast matmul operands to bf16 ---
    Bp = pl.cdiv(B, tile_b) * tile_b
    xp = jnp.zeros((Bp, K1), jnp.bfloat16).at[:B, :784].set(x2d.astype(jnp.bfloat16))

    w1p = jnp.zeros((K1, H1), jnp.bfloat16).at[:784, :].set(w1.astype(jnp.bfloat16))
    w2p = w2.astype(jnp.bfloat16)
    w3p = jnp.zeros((H2, H3), jnp.bfloat16).at[:, :64].set(w3.astype(jnp.bfloat16))
    w4p = jnp.zeros((H3, OUT), jnp.bfloat16).at[:64, :10].set(w4.astype(jnp.bfloat16))

    b1p = b1.astype(jnp.float32)
    b2p = b2.astype(jnp.float32)
    b3p = jnp.zeros((1, H3), jnp.float32).at[:, :64].set(b3.astype(jnp.float32))
    b4p = jnp.zeros((1, OUT), jnp.float32).at[:, :10].set(b4.astype(jnp.float32))

    nb = Bp // tile_b

    def resident(shape):
        # Constant block index -> DMA'd once, stays VMEM-resident across grid steps.
        return pl.BlockSpec(shape, lambda i: (0, 0))

    grid_spec = pltpu.PrefetchScalarGridSpec(
        num_scalar_prefetch=0,
        grid=(nb,),
        in_specs=[
            pl.BlockSpec((tile_b, K1), lambda i: (i, 0)),   # input: tiled along batch
            resident((K1, H1)), resident((1, H1)),
            resident((H1, H2)), resident((1, H2)),
            resident((H2, H3)), resident((1, H3)),
            resident((H3, OUT)), resident((1, OUT)),
        ],
        out_specs=pl.BlockSpec((tile_b, OUT), lambda i: (i, 0)),
    )

    flops = 2 * Bp * (K1 * H1 + H1 * H2 + H2 * H3 + H3 * OUT)
    bytes_accessed = (
        xp.size * 2
        + (w1p.size + w2p.size + w3p.size + w4p.size) * 2
        + (b1p.size + b2p.size + b3p.size + b4p.size) * 4
        + Bp * OUT * 4
    )

    out = pl.pallas_call(
        _mlp_kernel,
        out_shape=jax.ShapeDtypeStruct((Bp, OUT), jnp.float32),
        grid_spec=grid_spec,
        compiler_params=pltpu.CompilerParams(
            dimension_semantics=("parallel",)),      # v7x: split batch across 2 TCs
        cost_estimate=pl.CostEstimate(
            flops=flops, transcendentals=0, bytes_accessed=bytes_accessed),
    )(xp, w1p, b1p, w2p, b2p, w3p, b3p, w4p, b4p)

    return out[:B, :10]


def init_params(key):
    """Deterministic init mirroring nn.Linear shapes (stored as (in, out))."""
    sizes = [(28 * 28, 256), (256, 128), (128, 64), (64, 10)]
    params = []
    for i, (fan_in, fan_out) in enumerate(sizes):
        kw, kb = jax.random.split(jax.random.fold_in(key, i))
        bound = 1.0 / (fan_in ** 0.5)  # PyTorch nn.Linear default uniform bound
        w = jax.random.uniform(kw, (fan_in, fan_out), jnp.float32, -bound, bound)
        b = jax.random.uniform(kb, (1, fan_out), jnp.float32, -bound, bound)
        params.append((w, b))
    return params


if __name__ == "__main__":
    key = jax.random.PRNGKey(0)
    k_x, k_p = jax.random.split(key)

    # Small MNIST-like batch: (B=8, C=1, H=28, W=28)
    x = jax.random.normal(k_x, (8, 1, 28, 28), dtype=jnp.float32)
    params = init_params(k_p)

    logits = digit_identifier_forward(x, params)
    jax.block_until_ready(logits)

    # Plain-JAX reference with the same bf16-input / f32-accumulate recipe.
    ref = x.reshape(-1, 28 * 28).astype(jnp.bfloat16)
    for i, (w, b) in enumerate(params):
        ref = jnp.dot(ref, w.astype(jnp.bfloat16),
                      preferred_element_type=jnp.float32) + b
        if i < 3:
            ref = jnp.maximum(ref, 0.0).astype(jnp.bfloat16)

    assert logits.shape == (8, 10)
    assert jnp.allclose(logits, ref, atol=1e-2, rtol=1e-2), (
        float(jnp.max(jnp.abs(logits - ref))))

    print("KERNEL_OK")
</pallas_src>

<mosaic_0001>
module attributes {stable_mosaic.version = 11 : i64} {
  func.func @_mlp_kernel(%arg0: i32, %arg1: memref<256x896xbf16, #tpu.memory_space<vmem>>, %arg2: memref<896x256xbf16, #tpu.memory_space<vmem>>, %arg3: memref<1x256xf32, #tpu.memory_space<vmem>>, %arg4: memref<256x128xbf16, #tpu.memory_space<vmem>>, %arg5: memref<1x128xf32, #tpu.memory_space<vmem>>, %arg6: memref<128x128xbf16, #tpu.memory_space<vmem>>, %arg7: memref<1x128xf32, #tpu.memory_space<vmem>>, %arg8: memref<128x128xbf16, #tpu.memory_space<vmem>>, %arg9: memref<1x128xf32, #tpu.memory_space<vmem>>, %arg10: memref<256x128xf32, #tpu.memory_space<vmem>>) attributes {dimension_semantics = [#tpu.dimension_semantics<parallel>], iteration_bounds = array<i64: 1>, scalar_prefetch = 0 : i64, scratch_operands = 0 : i64, tpu.core_type = #tpu.core_type<tc>, window_params = [{transform_indices = @transform_0, window_bounds = array<i64: 256, 896>}, {pipeline_mode = #tpu.pipeline_mode<synchronous>, transform_indices = @transform_1, window_bounds = array<i64: 896, 256>}, {pipeline_mode = #tpu.pipeline_mode<synchronous>, transform_indices = @transform_2, window_bounds = array<i64: 1, 256>}, {pipeline_mode = #tpu.pipeline_mode<synchronous>, transform_indices = @transform_3, window_bounds = array<i64: 256, 128>}, {pipeline_mode = #tpu.pipeline_mode<synchronous>, transform_indices = @transform_4, window_bounds = array<i64: 1, 128>}, {pipeline_mode = #tpu.pipeline_mode<synchronous>, transform_indices = @transform_5, window_bounds = array<i64: 128, 128>}, {pipeline_mode = #tpu.pipeline_mode<synchronous>, transform_indices = @transform_6, window_bounds = array<i64: 1, 128>}, {pipeline_mode = #tpu.pipeline_mode<synchronous>, transform_indices = @transform_7, window_bounds = array<i64: 128, 128>}, {pipeline_mode = #tpu.pipeline_mode<synchronous>, transform_indices = @transform_8, window_bounds = array<i64: 1, 128>}, {transform_indices = @transform_9, window_bounds = array<i64: 256, 128>}]} {
    %c0 = arith.constant 0 : index
    %c0_0 = arith.constant 0 : index
    %0 = vector.load %arg1[%c0, %c0_0] : memref<256x896xbf16, #tpu.memory_space<vmem>>, vector<256x896xbf16>
    %c0_1 = arith.constant 0 : index
    %c0_2 = arith.constant 0 : index
    %1 = vector.load %arg2[%c0_1, %c0_2] : memref<896x256xbf16, #tpu.memory_space<vmem>>, vector<896x256xbf16>
    %cst = arith.constant dense<0.000000e+00> : vector<256x256xf32>
    %2 = tpu.matmul %0, %1, %cst {dimension_numbers = #tpu.dot_dimension_numbers<[1], [0], [0], [1], [0, 0, 1, 1], [], []>} : vector<256x896xbf16>, vector<896x256xbf16>, vector<256x256xf32> -> vector<256x256xf32>
    %c0_3 = arith.constant 0 : index
    %c0_4 = arith.constant 0 : index
    %3 = vector.load %arg3[%c0_3, %c0_4] : memref<1x256xf32, #tpu.memory_space<vmem>>, vector<1x256xf32>
    %4 = vector.broadcast %3 : vector<1x256xf32> to vector<256x256xf32>
    %5 = arith.addf %2, %4 : vector<256x256xf32>
    %cst_5 = arith.constant 0.000000e+00 : f32
    %6 = vector.broadcast %cst_5 : f32 to vector<256x256xf32>
    %7 = arith.maximumf %5, %6 : vector<256x256xf32>
    %8 = arith.truncf %7 : vector<256x256xf32> to vector<256x256xbf16>
    %c0_6 = arith.constant 0 : index
    %c0_7 = arith.constant 0 : index
    %9 = vector.load %arg4[%c0_6, %c0_7] : memref<256x128xbf16, #tpu.memory_space<vmem>>, vector<256x128xbf16>
    %cst_8 = arith.constant dense<0.000000e+00> : vector<256x128xf32>
    %10 = tpu.matmul %8, %9, %cst_8 {dimension_numbers = #tpu.dot_dimension_numbers<[1], [0], [0], [1], [0, 0, 1, 1], [], []>} : vector<256x256xbf16>, vector<256x128xbf16>, vector<256x128xf32> -> vector<256x128xf32>
    %c0_9 = arith.constant 0 : index
    %c0_10 = arith.constant 0 : index
    %11 = vector.load %arg5[%c0_9, %c0_10] : memref<1x128xf32, #tpu.memory_space<vmem>>, vector<1x128xf32>
    %12 = vector.broadcast %11 : vector<1x128xf32> to vector<256x128xf32>
    %13 = arith.addf %10, %12 : vector<256x128xf32>
    %cst_11 = arith.constant 0.000000e+00 : f32
    %14 = vector.broadcast %cst_11 : f32 to vector<256x128xf32>
    %15 = arith.maximumf %13, %14 : vector<256x128xf32>
    %16 = arith.truncf %15 : vector<256x128xf32> to vector<256x128xbf16>
    %c0_12 = arith.constant 0 : index
    %c0_13 = arith.constant 0 : index
    %17 = vector.load %arg6[%c0_12, %c0_13] : memref<128x128xbf16, #tpu.memory_space<vmem>>, vector<128x128xbf16>
    %cst_14 = arith.constant dense<0.000000e+00> : vector<256x128xf32>
    %18 = tpu.matmul %16, %17, %cst_14 {dimension_numbers = #tpu.dot_dimension_numbers<[1], [0], [0], [1], [0, 0, 1, 1], [], []>} : vector<256x128xbf16>, vector<128x128xbf16>, vector<256x128xf32> -> vector<256x128xf32>
    %c0_15 = arith.constant 0 : index
    %c0_16 = arith.constant 0 : index
    %19 = vector.load %arg7[%c0_15, %c0_16] : memref<1x128xf32, #tpu.memory_space<vmem>>, vector<1x128xf32>
    %20 = vector.broadcast %19 : vector<1x128xf32> to vector<256x128xf32>
    %21 = arith.addf %18, %20 : vector<256x128xf32>
    %cst_17 = arith.constant 0.000000e+00 : f32
    %22 = vector.broadcast %cst_17 : f32 to vector<256x128xf32>
    %23 = arith.maximumf %21, %22 : vector<256x128xf32>
    %24 = arith.truncf %23 : vector<256x128xf32> to vector<256x128xbf16>
    %c0_18 = arith.constant 0 : index
    %c0_19 = arith.constant 0 : index
    %25 = vector.load %arg8[%c0_18, %c0_19] : memref<128x128xbf16, #tpu.memory_space<vmem>>, vector<128x128xbf16>
    %cst_20 = arith.constant dense<0.000000e+00> : vector<256x128xf32>
    %26 = tpu.matmul %24, %25, %cst_20 {dimension_numbers = #tpu.dot_dimension_numbers<[1], [0], [0], [1], [0, 0, 1, 1], [], []>} : vector<256x128xbf16>, vector<128x128xbf16>, vector<256x128xf32> -> vector<256x128xf32>
    %c0_21 = arith.constant 0 : index
    %c0_22 = arith.constant 0 : index
    %27 = vector.load %arg9[%c0_21, %c0_22] : memref<1x128xf32, #tpu.memory_space<vmem>>, vector<1x128xf32>
    %28 = vector.broadcast %27 : vector<1x128xf32> to vector<256x128xf32>
    %29 = arith.addf %26, %28 : vector<256x128xf32>
    %c0_23 = arith.constant 0 : index
    %c0_24 = arith.constant 0 : index
    %30 = vector.load %arg10[%c0_23, %c0_24] : memref<256x128xf32, #tpu.memory_space<vmem>>, vector<256x128xf32>
    tpu.vector_store %arg10[%c0_23, %c0_24], %29 {strides = array<i32>} : memref<256x128xf32, #tpu.memory_space<vmem>>, vector<256x128xf32>,
    return
  }
  func.func @transform_0(%arg0: i32) -> (i32, i32) {
    %c0_i32 = arith.constant 0 : i32
    %c0_i32_0 = arith.constant 0 : i32
    return %arg0, %c0_i32 : i32, i32
  }
  func.func @transform_1(%arg0: i32) -> (i32, i32) {
    %c0_i32 = arith.constant 0 : i32
    %c0_i32_0 = arith.constant 0 : i32
    %c0_i32_1 = arith.constant 0 : i32
    return %c0_i32, %c0_i32_0 : i32, i32
  }
  func.func @transform_2(%arg0: i32) -> (i32, i32) {
    %c0_i32 = arith.constant 0 : i32
    %c0_i32_0 = arith.constant 0 : i32
    %c0_i32_1 = arith.constant 0 : i32
    return %c0_i32, %c0_i32_0 : i32, i32
  }
  func.func @transform_3(%arg0: i32) -> (i32, i32) {
    %c0_i32 = arith.constant 0 : i32
    %c0_i32_0 = arith.constant 0 : i32
    %c0_i32_1 = arith.constant 0 : i32
    return %c0_i32, %c0_i32_0 : i32, i32
  }
  func.func @transform_4(%arg0: i32) -> (i32, i32) {
    %c0_i32 = arith.constant 0 : i32
    %c0_i32_0 = arith.constant 0 : i32
    %c0_i32_1 = arith.constant 0 : i32
    return %c0_i32, %c0_i32_0 : i32, i32
  }
  func.func @transform_5(%arg0: i32) -> (i32, i32) {
    %c0_i32 = arith.constant 0 : i32
    %c0_i32_0 = arith.constant 0 : i32
    %c0_i32_1 = arith.constant 0 : i32
    return %c0_i32, %c0_i32_0 : i32, i32
  }
  func.func @transform_6(%arg0: i32) -> (i32, i32) {
    %c0_i32 = arith.constant 0 : i32
    %c0_i32_0 = arith.constant 0 : i32
    %c0_i32_1 = arith.constant 0 : i32
    return %c0_i32, %c0_i32_0 : i32, i32
  }
  func.func @transform_7(%arg0: i32) -> (i32, i32) {
    %c0_i32 = arith.constant 0 : i32
    %c0_i32_0 = arith.constant 0 : i32
    %c0_i32_1 = arith.constant 0 : i32
    return %c0_i32, %c0_i32_0 : i32, i32
  }
  func.func @transform_8(%arg0: i32) -> (i32, i32) {
    %c0_i32 = arith.constant 0 : i32
    %c0_i32_0 = arith.constant 0 : i32
    %c0_i32_1 = arith.constant 0 : i32
    return %c0_i32, %c0_i32_0 : i32, i32
  }
  func.func @transform_9(%arg0: i32) -> (i32, i32) {
    %c0_i32 = arith.constant 0 : i32
    %c0_i32_0 = arith.constant 0 : i32
    return %arg0, %c0_i32 : i32, i32
  }
}

</mosaic_0001>

<llo_original>
// kernel: tpu_custom_call.1
$region0: #{tpu_custom_call.1}
  #allocation0 [shape = 'u32[]', space=smem, size = 0x4, offset = 0x4, fixed_abs, tag = 'smem constant byte address 0x4 - core index']
  #allocation1 [shape = 'u32[144,128]{1,0:T(1,128)}', space=vmem, size = 0x12000, scoped, tag = 'internal scratch']
  %s0 = inlined_call_operand.hbm [shape: bf16[256,896], index: 0, kind: input, shape index: {}]
  %s1 = inlined_call_operand.hbm [shape: bf16[896,256], index: 1, kind: input, shape index: {}]
  %s2 = inlined_call_operand.vmem [shape: f32[1,256], index: 2, kind: input, shape index: {}]
  %s3 = inlined_call_operand.hbm [shape: bf16[256,128], index: 3, kind: input, shape index: {}]
  %s4 = inlined_call_operand.vmem [shape: f32[1,128], index: 4, kind: input, shape index: {}]
  %s5 = inlined_call_operand.hbm [shape: bf16[128,128], index: 5, kind: input, shape index: {}]
  %s6 = inlined_call_operand.vmem [shape: f32[1,128], index: 6, kind: input, shape index: {}]
  %s7 = inlined_call_operand.hbm [shape: bf16[128,128], index: 7, kind: input, shape index: {}]
  %s8 = inlined_call_operand.vmem [shape: f32[1,128], index: 8, kind: input, shape index: {}]
  %s9 = inlined_call_operand.hbm [shape: f32[256,128], index: 9, kind: output, shape index: {}]
  %s10 = sld [smem:[#allocation0]]
  $region66: #{tpu_custom_call.1} parent=0
    _
  %s12 = ssub.s32 1, %s10
  %s13 = scalar_select 0, %s12, %s10
  $region1: #{tpu_custom_call.1} parent=0
    #allocation2 [shape = 'u8[458752]{0}', space=vmem, size = 0x70000, scoped, tag = 'input window, operand 0, single buffered']
    #allocation3 [shape = 's32[1]{0}', space=sflag, size = 0x4, scoped, tag = 'scoped memory for tpu_custom_call.1']
    #allocation4 [shape = 's32[1]{0}', space=sflag, size = 0x4, scoped, tag = 'scoped memory for tpu_custom_call.1']
    #allocation5 [shape = 'u8[458752]{0}', space=vmem, size = 0x70000, scoped, tag = 'input window, operand 1, single buffered']
    #allocation6 [shape = 's32[1]{0}', space=sflag, size = 0x4, scoped, tag = 'scoped memory for tpu_custom_call.1']
    #allocation7 [shape = 'u8[65536]{0}', space=vmem, size = 0x10000, scoped, tag = 'input window, operand 3, single buffered']
    #allocation8 [shape = 'u8[32768]{0}', space=vmem, size = 0x8000, scoped, tag = 'input window, operand 5, single buffered']
    #allocation9 [shape = 's32[1]{0}', space=sflag, size = 0x4, scoped, tag = 'scoped memory for tpu_custom_call.1']
    #allocation10 [shape = 'u8[32768]{0}', space=vmem, size = 0x8000, scoped, tag = 'input window, operand 7, single buffered']
    #allocation11 [shape = 'u8[131072]{0}', space=vmem, size = 0x20000, scoped, tag = 'output window, operand 0, single buffered']
    %14 = vsyncpa [#allocation3], 0
    %15 = vsyncpa [#allocation6], 0
    %16 = vsyncpa [#allocation9], 0
    %17 = vsyncpa [#allocation4], 0
    // Predicated region
    $region2: #{tpu_custom_call.1} parent=1 // pred_check
      _
    $region3: #{tpu_custom_call.1} parent=1 // pred_check_branch
      %19 = sbr.rel (0) target = $region5
    $region4: #{tpu_custom_call.1} parent=1 // pred_region
      %s21 = ssub.s32 14336, 14336
      %22 = vsyncadd [#allocation3], %s21
      %s23 = sshll.u32 [#allocation2], 4
      %s24 = int_to_ptr.vmem [resolvable:$true] %s23
      %29 = dma.hbm_to_vmem [thread:$0]  %s0, 14336, %s24, [#allocation3], 448, 448, 28
    $region5: #{tpu_custom_call.1} parent=1 // pred_fallthru
      _
    // Predicated region
    $region6: #{tpu_custom_call.1} parent=1 // pred_check
      _
    $region7: #{tpu_custom_call.1} parent=1 // pred_check_branch
      %31 = sbr.rel (0) target = $region9
    $region8: #{tpu_custom_call.1} parent=1 // pred_region
      %s33 = ssub.s32 14336, 14336
      %34 = vsyncadd [#allocation6], %s33
      %s35 = sshll.u32 [#allocation5], 4
      %s36 = int_to_ptr.vmem [resolvable:$true] %s35
      %41 = dma.hbm_to_vmem [thread:$0]  %s1, 14336, %s36, [#allocation6], 128, 128, 8
    $region9: #{tpu_custom_call.1} parent=1 // pred_fallthru
      _
    // Predicated region
    $region10: #{tpu_custom_call.1} parent=1 // pred_check
      _
    $region11: #{tpu_custom_call.1} parent=1 // pred_check_branch
      %43 = sbr.rel (0) target = $region13
    $region12: #{tpu_custom_call.1} parent=1 // pred_region
      _
    $region13: #{tpu_custom_call.1} parent=1 // pred_fallthru
      _
    // Predicated region
    $region14: #{tpu_custom_call.1} parent=1 // pred_check
      _
    $region15: #{tpu_custom_call.1} parent=1 // pred_check_branch
      %45 = sbr.rel (0) target = $region17
    $region16: #{tpu_custom_call.1} parent=1 // pred_region
      %s47 = ssub.s32 2048, 2048
      %48 = vsyncadd [#allocation6], %s47
      %s49 = sshll.u32 [#allocation7], 4
      %s50 = int_to_ptr.vmem [resolvable:$true] %s49
      %55 = dma.hbm_to_vmem [thread:$0]  %s3, 2048, %s50, [#allocation6], 64, 64, 4
    $region17: #{tpu_custom_call.1} parent=1 // pred_fallthru
      _
    // Predicated region
    $region18: #{tpu_custom_call.1} parent=1 // pred_check
      _
    $region19: #{tpu_custom_call.1} parent=1 // pred_check_branch
      %57 = sbr.rel (0) target = $region21
    $region20: #{tpu_custom_call.1} parent=1 // pred_region
      _
    $region21: #{tpu_custom_call.1} parent=1 // pred_fallthru
      _
    // Predicated region
    $region22: #{tpu_custom_call.1} parent=1 // pred_check
      _
    $region23: #{tpu_custom_call.1} parent=1 // pred_check_branch
      %59 = sbr.rel (0) target = $region25
    $region24: #{tpu_custom_call.1} parent=1 // pred_region
      %s61 = ssub.s32 1024, 1024
      %62 = vsyncadd [#allocation9], %s61
      %s63 = sshll.u32 [#allocation8], 4
      %s64 = int_to_ptr.vmem [resolvable:$true] %s63
      %69 = dma.hbm_to_vmem [thread:$0]  %s5, 1024, %s64, [#allocation9], 64, 64, 4
    $region25: #{tpu_custom_call.1} parent=1 // pred_fallthru
      _
    // Predicated region
    $region26: #{tpu_custom_call.1} parent=1 // pred_check
      _
    $region27: #{tpu_custom_call.1} parent=1 // pred_check_branch
      %71 = sbr.rel (0) target = $region29
    $region28: #{tpu_custom_call.1} parent=1 // pred_region
      _
    $region29: #{tpu_custom_call.1} parent=1 // pred_fallthru
      _
    // Predicated region
    $region30: #{tpu_custom_call.1} parent=1 // pred_check
      _
    $region31: #{tpu_custom_call.1} parent=1 // pred_check_branch
      %73 = sbr.rel (0) target = $region33
    $region32: #{tpu_custom_call.1} parent=1 // pred_region
      %s75 = ssub.s32 1024, 1024
      %76 = vsyncadd [#allocation9], %s75
      %s77 = sshll.u32 [#allocation10], 4
      %s78 = int_to_ptr.vmem [resolvable:$true] %s77
      %83 = dma.hbm_to_vmem [thread:$0]  %s7, 1024, %s78, [#allocation9], 64, 64, 4
    $region33: #{tpu_custom_call.1} parent=1 // pred_fallthru
      _
    // Predicated region
    $region34: #{tpu_custom_call.1} parent=1 // pred_check
      _
    $region35: #{tpu_custom_call.1} parent=1 // pred_check_branch
      %85 = sbr.rel (0) target = $region37
    $region36: #{tpu_custom_call.1} parent=1 // pred_region
      _
    $region37: #{tpu_custom_call.1} parent=1 // pred_fallthru
      _
    // Predicated region
    $region38: #{tpu_custom_call.1} parent=1 // pred_check
      _
    $region39: #{tpu_custom_call.1} parent=1 // pred_check_branch
      %87 = sbr.rel (0) target = $region41
    $region40: #{tpu_custom_call.1} parent=1 // pred_region
      %88 = dma.done [#allocation3], 14336
    $region41: #{tpu_custom_call.1} parent=1 // pred_fallthru
      _
    // Predicated region
    $region42: #{tpu_custom_call.1} parent=1 // pred_check
      _
    $region43: #{tpu_custom_call.1} parent=1 // pred_check_branch
      %90 = sbr.rel (0) target = $region45
    $region44: #{tpu_custom_call.1} parent=1 // pred_region
      %91 = dma.done [#allocation6], 14336
    $region45: #{tpu_custom_call.1} parent=1 // pred_fallthru
      _
    // Predicated region
    $region46: #{tpu_custom_call.1} parent=1 // pred_check
      _
    $region47: #{tpu_custom_call.1} parent=1 // pred_check_branch
      %93 = sbr.rel (0) target = $region49
    $region48: #{tpu_custom_call.1} parent=1 // pred_region
      %94 = dma.done [#allocation6], 2048
    $region49: #{tpu_custom_call.1} parent=1 // pred_fallthru
      _
    // Predicated region
    $region50: #{tpu_custom_call.1} parent=1 // pred_check
      _
    $region51: #{tpu_custom_call.1} parent=1 // pred_check_branch
      %96 = sbr.rel (0) target = $region53
    $region52: #{tpu_custom_call.1} parent=1 // pred_region
      %97 = dma.done [#allocation9], 1024
    $region53: #{tpu_custom_call.1} parent=1 // pred_fallthru
      _
    // Predicated region
    $region54: #{tpu_custom_call.1} parent=1 // pred_check
      _
    $region55: #{tpu_custom_call.1} parent=1 // pred_check_branch
      %99 = sbr.rel (0) target = $region57
    $region56: #{tpu_custom_call.1} parent=1 // pred_region
      %100 = dma.done [#allocation9], 1024
    $region57: #{tpu_custom_call.1} parent=1 // pred_fallthru
      _
    %v102 = vld [vmem:[#allocation2] sm:$0xff]
    %v103 = vld [vmem:[#allocation2 + $0x8] sm:$0xff]
    %v104 = vld [vmem:[#allocation2 + $0x10] sm:$0xff]
    %v105 = vld [vmem:[#allocation2 + $0x18] sm:$0xf]
    %v106 = vld [vmem:[#allocation2 + $0x1c] sm:$0xff]
    %v107 = vld [vmem:[#allocation2 + $0x24] sm:$0xff]
    %v108 = vld [vmem:[#allocation2 + $0x2c] sm:$0xff]
    %v109 = vld [vmem:[#allocation2 + $0x34] sm:$0xf]
    %v110 = vld [vmem:[#allocation2 + $0x38] sm:$0xff]
    %v111 = vld [vmem:[#allocation2 + $0x40] sm:$0xff]
    %v112 = vld [vmem:[#allocation2 + $0x48] sm:$0xff]
    %v113 = vld [vmem:[#allocation2 + $0x50] sm:$0xf]
    %v114 = vld [vmem:[#allocation2 + $0x54] sm:$0xff]
    %v115 = vld [vmem:[#allocation2 + $0x5c] sm:$0xff]
    %v116 = vld [vmem:[#allocation2 + $0x64] sm:$0xff]
    %v117 = vld [vmem:[#allocation2 + $0x6c] sm:$0xf]
    %v118 = vld [vmem:[#allocation2 + $0x70] sm:$0xff]
    %v119 = vld [vmem:[#allocation2 + $0x78] sm:$0xff]
    %v120 = vld [vmem:[#allocation2 + $0x80] sm:$0xff]
    %v121 = vld [vmem:[#allocation2 + $0x88] sm:$0xf]
    %v122 = vld [vmem:[#allocation2 + $0x8c] sm:$0xff]
    %v123 = vld [vmem:[#allocation2 + $0x94] sm:$0xff]
    %v124 = vld [vmem:[#allocation2 + $0x9c] sm:$0xff]
    %v125 = vld [vmem:[#allocation2 + $0xa4] sm:$0xf]
    %v126 = vld [vmem:[#allocation2 + $0xa8] sm:$0xff]
    %v127 = vld [vmem:[#allocation2 + $0xb0] sm:$0xff]
    %v128 = vld [vmem:[#allocation2 + $0xb8] sm:$0xff]
    %v129 = vld [vmem:[#allocation2 + $0xc0] sm:$0xf]
    %v130 = vld [vmem:[#allocation2 + $0xc4] sm:$0xff]
    %v131 = vld [vmem:[#allocation2 + $0xcc] sm:$0xff]
    %v132 = vld [vmem:[#allocation2 + $0xd4] sm:$0xff]
    %v133 = vld [vmem:[#allocation2 + $0xdc] sm:$0xf]
    %v134 = vld [vmem:[#allocation2 + $0xe0] sm:$0xff]
    %v135 = vld [vmem:[#allocation2 + $0xe8] sm:$0xff]
    %v136 = vld [vmem:[#allocation2 + $0xf0] sm:$0xff]
    %v137 = vld [vmem:[#allocation2 + $0xf8] sm:$0xf]
    %v138 = vld [vmem:[#allocation2 + $0xfc] sm:$0xff]
    %v139 = vld [vmem:[#allocation2 + $0x104] sm:$0xff]
    %v140 = vld [vmem:[#allocation2 + $0x10c] sm:$0xff]
    %v141 = vld [vmem:[#allocation2 + $0x114] sm:$0xf]
    %v142 = vld [vmem:[#allocation2 + $0x118] sm:$0xff]
    %v143 = vld [vmem:[#allocation2 + $0x120] sm:$0xff]
    %v144 = vld [vmem:[#allocation2 + $0x128] sm:$0xff]
    %v145 = vld [vmem:[#allocation2 + $0x130] sm:$0xf]
    %v146 = vld [vmem:[#allocation2 + $0x134] sm:$0xff]
    %v147 = vld [vmem:[#allocation2 + $0x13c] sm:$0xff]
    %v148 = vld [vmem:[#allocation2 + $0x144] sm:$0xff]
    %v149 = vld [vmem:[#allocation2 + $0x14c] sm:$0xf]
    %v150 = vld [vmem:[#allocation2 + $0x150] sm:$0xff]
    %v151 = vld [vmem:[#allocation2 + $0x158] sm:$0xff]
    %v152 = vld [vmem:[#allocation2 + $0x160] sm:$0xff]
    %v153 = vld [vmem:[#allocation2 + $0x168] sm:$0xf]
    %v154 = vld [vmem:[#allocation2 + $0x16c] sm:$0xff]
    %v155 = vld [vmem:[#allocation2 + $0x174] sm:$0xff]
    %v156 = vld [vmem:[#allocation2 + $0x17c] sm:$0xff]
    %v157 = vld [vmem:[#allocation2 + $0x184] sm:$0xf]
    %v158 = vld [vmem:[#allocation2 + $0x188] sm:$0xff]
    %v159 = vld [vmem:[#allocation2 + $0x190] sm:$0xff]
    %v160 = vld [vmem:[#allocation2 + $0x198] sm:$0xff]
    %v161 = vld [vmem:[#allocation2 + $0x1a0] sm:$0xf]
    %v162 = vld [vmem:[#allocation2 + $0x1a4] sm:$0xff]
    %v163 = vld [vmem:[#allocation2 + $0x1ac] sm:$0xff]
    %v164 = vld [vmem:[#allocation2 + $0x1b4] sm:$0xff]
    %v165 = vld [vmem:[#allocation2 + $0x1bc] sm:$0xf]
    %v166 = vld [vmem:[#allocation2 + $0x1c0] sm:$0xff]
    %v167 = vld [vmem:[#allocation2 + $0x1c8] sm:$0xff]
    %v168 = vld [vmem:[#allocation2 + $0x1d0] sm:$0xff]
    %v169 = vld [vmem:[#allocation2 + $0x1d8] sm:$0xf]
    %v170 = vld [vmem:[#allocation2 + $0x1dc] sm:$0xff]
    %v171 = vld [vmem:[#allocation2 + $0x1e4] sm:$0xff]
    %v172 = vld [vmem:[#allocation2 + $0x1ec] sm:$0xff]
    %v173 = vld [vmem:[#allocation2 + $0x1f4] sm:$0xf]
    %v174 = vld [vmem:[#allocation2 + $0x1f8] sm:$0xff]
    %v175 = vld [vmem:[#allocation2 + $0x200] sm:$0xff]
    %v176 = vld [vmem:[#allocation2 + $0x208] sm:$0xff]
    %v177 = vld [vmem:[#allocation2 + $0x210] sm:$0xf]
    %v178 = vld [vmem:[#allocation2 + $0x214] sm:$0xff]
    %v179 = vld [vmem:[#allocation2 + $0x21c] sm:$0xff]
    %v180 = vld [vmem:[#allocation2 + $0x224] sm:$0xff]
    %v181 = vld [vmem:[#allocation2 + $0x22c] sm:$0xf]
    %v182 = vld [vmem:[#allocation2 + $0x230] sm:$0xff]
    %v183 = vld [vmem:[#allocation2 + $0x238] sm:$0xff]
    %v184 = vld [vmem:[#allocation2 + $0x240] sm:$0xff]
    %v185 = vld [vmem:[#allocation2 + $0x248] sm:$0xf]
    %v186 = vld [vmem:[#allocation2 + $0x24c] sm:$0xff]
    %v187 = vld [vmem:[#allocation2 + $0x254] sm:$0xff]
    %v188 = vld [vmem:[#allocation2 + $0x25c] sm:$0xff]
    %v189 = vld [vmem:[#allocation2 + $0x264] sm:$0xf]
    %v190 = vld [vmem:[#allocation2 + $0x268] sm:$0xff]
    %v191 = vld [vmem:[#allocation2 + $0x270] sm:$0xff]
    %v192 = vld [vmem:[#allocation2 + $0x278] sm:$0xff]
    %v193 = vld [vmem:[#allocation2 + $0x280] sm:$0xf]
    %v194 = vld [vmem:[#allocation2 + $0x284] sm:$0xff]
    %v195 = vld [vmem:[#allocation2 + $0x28c] sm:$0xff]
    %v196 = vld [vmem:[#allocation2 + $0x294] sm:$0xff]
    %v197 = vld [vmem:[#allocation2 + $0x29c] sm:$0xf]
    %v198 = vld [vmem:[#allocation2 + $0x2a0] sm:$0xff]
    %v199 = vld [vmem:[#allocation2 + $0x2a8] sm:$0xff]
    %v200 = vld [vmem:[#allocation2 + $0x2b0] sm:$0xff]
    %v201 = vld [vmem:[#allocation2 + $0x2b8] sm:$0xf]
    %v202 = vld [vmem:[#allocation2 + $0x2bc] sm:$0xff]
    %v203 = vld [vmem:[#allocation2 + $0x2c4] sm:$0xff]
    %v204 = vld [vmem:[#allocation2 + $0x2cc] sm:$0xff]
    %v205 = vld [vmem:[#allocation2 + $0x2d4] sm:$0xf]
    %v206 = vld [vmem:[#allocation2 + $0x2d8] sm:$0xff]
    %v207 = vld [vmem:[#allocation2 + $0x2e0] sm:$0xff]
    %v208 = vld [vmem:[#allocation2 + $0x2e8] sm:$0xff]
    %v209 = vld [vmem:[#allocation2 + $0x2f0] sm:$0xf]
    %v210 = vld [vmem:[#allocation2 + $0x2f4] sm:$0xff]
    %v211 = vld [vmem:[#allocation2 + $0x2fc] sm:$0xff]
    %v212 = vld [vmem:[#allocation2 + $0x304] sm:$0xff]
    %v213 = vld [vmem:[#allocation2 + $0x30c] sm:$0xf]
    %v214 = vld [vmem:[#allocation2 + $0x310] sm:$0xff]
    %v215 = vld [vmem:[#allocation2 + $0x318] sm:$0xff]
    %v216 = vld [vmem:[#allocation2 + $0x320] sm:$0xff]
    %v217 = vld [vmem:[#allocation2 + $0x328] sm:$0xf]
    %v218 = vld [vmem:[#allocation2 + $0x32c] sm:$0xff]
    %v219 = vld [vmem:[#allocation2 + $0x334] sm:$0xff]
    %v220 = vld [vmem:[#allocation2 + $0x33c] sm:$0xff]
    %v221 = vld [vmem:[#allocation2 + $0x344] sm:$0xf]
    %v222 = vld [vmem:[#allocation2 + $0x348] sm:$0xff]
    %v223 = vld [vmem:[#allocation2 + $0x350] sm:$0xff]
    %v224 = vld [vmem:[#allocation2 + $0x358] sm:$0xff]
    %v225 = vld [vmem:[#allocation2 + $0x360] sm:$0xf]
    %v226 = vld [vmem:[#allocation2 + $0x364] sm:$0xff]
    %v227 = vld [vmem:[#allocation2 + $0x36c] sm:$0xff]
    %v228 = vld [vmem:[#allocation2 + $0x374] sm:$0xff]
    %v229 = vld [vmem:[#allocation2 + $0x37c] sm:$0xf]
    %v230 = vld [vmem:[#allocation5] sm:$0xff]
    %v231 = vld [vmem:[#allocation5 + $0x8] sm:$0xff]
    %v232 = vld [vmem:[#allocation5 + $0x10] sm:$0xff]
    %v233 = vld [vmem:[#allocation5 + $0x18] sm:$0xff]
    %v234 = vld [vmem:[#allocation5 + $0x20] sm:$0xff]
    %v235 = vld [vmem:[#allocation5 + $0x28] sm:$0xff]
    %v236 = vld [vmem:[#allocation5 + $0x30] sm:$0xff]
    %v237 = vld [vmem:[#allocation5 + $0x38] sm:$0xff]
    %v238 = vld [vmem:[#allocation5 + $0x40] sm:$0xff]
    %v239 = vld [vmem:[#allocation5 + $0x48] sm:$0xff]
    %v240 = vld [vmem:[#allocation5 + $0x50] sm:$0xff]
    %v241 = vld [vmem:[#allocation5 + $0x58] sm:$0xff]
    %v242 = vld [vmem:[#allocation5 + $0x60] sm:$0xff]
    %v243 = vld [vmem:[#allocation5 + $0x68] sm:$0xff]
    %v244 = vld [vmem:[#allocation5 + $0x70] sm:$0xff]
    %v245 = vld [vmem:[#allocation5 + $0x78] sm:$0xff]
    %v246 = vld [vmem:[#allocation5 + $0x80] sm:$0xff]
    %v247 = vld [vmem:[#allocation5 + $0x88] sm:$0xff]
    %v248 = vld [vmem:[#allocation5 + $0x90] sm:$0xff]
    %v249 = vld [vmem:[#allocation5 + $0x98] sm:$0xff]
    %v250 = vld [vmem:[#allocation5 + $0xa0] sm:$0xff]
    %v251 = vld [vmem:[#allocation5 + $0xa8] sm:$0xff]
    %v252 = vld [vmem:[#allocation5 + $0xb0] sm:$0xff]
    %v253 = vld [vmem:[#allocation5 + $0xb8] sm:$0xff]
    %v254 = vld [vmem:[#allocation5 + $0xc0] sm:$0xff]
    %v255 = vld [vmem:[#allocation5 + $0xc8] sm:$0xff]
    %v256 = vld [vmem:[#allocation5 + $0xd0] sm:$0xff]
    %v257 = vld [vmem:[#allocation5 + $0xd8] sm:$0xff]
    %v258 = vld [vmem:[#allocation5 + $0xe0] sm:$0xff]
    %v259 = vld [vmem:[#allocation5 + $0xe8] sm:$0xff]
    %v260 = vld [vmem:[#allocation5 + $0xf0] sm:$0xff]
    %v261 = vld [vmem:[#allocation5 + $0xf8] sm:$0xff]
    %v262 = vld [vmem:[#allocation5 + $0x100] sm:$0xff]
    %v263 = vld [vmem:[#allocation5 + $0x108] sm:$0xff]
    %v264 = vld [vmem:[#allocation5 + $0x110] sm:$0xff]
    %v265 = vld [vmem:[#allocation5 + $0x118] sm:$0xff]
    %v266 = vld [vmem:[#allocation5 + $0x120] sm:$0xff]
    %v267 = vld [vmem:[#allocation5 + $0x128] sm:$0xff]
    %v268 = vld [vmem:[#allocation5 + $0x130] sm:$0xff]
    %v269 = vld [vmem:[#allocation5 + $0x138] sm:$0xff]
    %v270 = vld [vmem:[#allocation5 + $0x140] sm:$0xff]
    %v271 = vld [vmem:[#allocation5 + $0x148] sm:$0xff]
    %v272 = vld [vmem:[#allocation5 + $0x150] sm:$0xff]
    %v273 = vld [vmem:[#allocation5 + $0x158] sm:$0xff]
    %v274 = vld [vmem:[#allocation5 + $0x160] sm:$0xff]
    %v275 = vld [vmem:[#allocation5 + $0x168] sm:$0xff]
    %v276 = vld [vmem:[#allocation5 + $0x170] sm:$0xff]
    %v277 = vld [vmem:[#allocation5 + $0x178] sm:$0xff]
    %v278 = vld [vmem:[#allocation5 + $0x180] sm:$0xff]
    %v279 = vld [vmem:[#allocation5 + $0x188] sm:$0xff]
    %v280 = vld [vmem:[#allocation5 + $0x190] sm:$0xff]
    %v281 = vld [vmem:[#allocation5 + $0x198] sm:$0xff]
    %v282 = vld [vmem:[#allocation5 + $0x1a0] sm:$0xff]
    %v283 = vld [vmem:[#allocation5 + $0x1a8] sm:$0xff]
    %v284 = vld [vmem:[#allocation5 + $0x1b0] sm:$0xff]
    %v285 = vld [vmem:[#allocation5 + $0x1b8] sm:$0xff]
    %v286 = vld [vmem:[#allocation5 + $0x1c0] sm:$0xff]
    %v287 = vld [vmem:[#allocation5 + $0x1c8] sm:$0xff]
    %v288 = vld [vmem:[#allocation5 + $0x1d0] sm:$0xff]
    %v289 = vld [vmem:[#allocation5 + $0x1d8] sm:$0xff]
    %v290 = vld [vmem:[#allocation5 + $0x1e0] sm:$0xff]
    %v291 = vld [vmem:[#allocation5 + $0x1e8] sm:$0xff]
    %v292 = vld [vmem:[#allocation5 + $0x1f0] sm:$0xff]
    %v293 = vld [vmem:[#allocation5 + $0x1f8] sm:$0xff]
    %v294 = vld [vmem:[#allocation5 + $0x200] sm:$0xff]
    %v295 = vld [vmem:[#allocation5 + $0x208] sm:$0xff]
    %v296 = vld [vmem:[#allocation5 + $0x210] sm:$0xff]
    %v297 = vld [vmem:[#allocation5 + $0x218] sm:$0xff]
    %v298 = vld [vmem:[#allocation5 + $0x220] sm:$0xff]
    %v299 = vld [vmem:[#allocation5 + $0x228] sm:$0xff]
    %v300 = vld [vmem:[#allocation5 + $0x230] sm:$0xff]
    %v301 = vld [vmem:[#allocation5 + $0x238] sm:$0xff]
    %v302 = vld [vmem:[#allocation5 + $0x240] sm:$0xff]
    %v303 = vld [vmem:[#allocation5 + $0x248] sm:$0xff]
    %v304 = vld [vmem:[#allocation5 + $0x250] sm:$0xff]
    %v305 = vld [vmem:[#allocation5 + $0x258] sm:$0xff]
    %v306 = vld [vmem:[#allocation5 + $0x260] sm:$0xff]
    %v307 = vld [vmem:[#allocation5 + $0x268] sm:$0xff]
    %v308 = vld [vmem:[#allocation5 + $0x270] sm:$0xff]
    %v309 = vld [vmem:[#allocation5 + $0x278] sm:$0xff]
    %v310 = vld [vmem:[#allocation5 + $0x280] sm:$0xff]
    %v311 = vld [vmem:[#allocation5 + $0x288] sm:$0xff]
    %v312 = vld [vmem:[#allocation5 + $0x290] sm:$0xff]
    %v313 = vld [vmem:[#allocation5 + $0x298] sm:$0xff]
    %v314 = vld [vmem:[#allocation5 + $0x2a0] sm:$0xff]
    %v315 = vld [vmem:[#allocation5 + $0x2a8] sm:$0xff]
    %v316 = vld [vmem:[#allocation5 + $0x2b0] sm:$0xff]
    %v317 = vld [vmem:[#allocation5 + $0x2b8] sm:$0xff]
    %v318 = vld [vmem:[#allocation5 + $0x2c0] sm:$0xff]
    %v319 = vld [vmem:[#allocation5 + $0x2c8] sm:$0xff]
    %v320 = vld [vmem:[#allocation5 + $0x2d0] sm:$0xff]
    %v321 = vld [vmem:[#allocation5 + $0x2d8] sm:$0xff]
    %v322 = vld [vmem:[#allocation5 + $0x2e0] sm:$0xff]
    %v323 = vld [vmem:[#allocation5 + $0x2e8] sm:$0xff]
    %v324 = vld [vmem:[#allocation5 + $0x2f0] sm:$0xff]
    %v325 = vld [vmem:[#allocation5 + $0x2f8] sm:$0xff]
    %v326 = vld [vmem:[#allocation5 + $0x300] sm:$0xff]
    %v327 = vld [vmem:[#allocation5 + $0x308] sm:$0xff]
    %v328 = vld [vmem:[#allocation5 + $0x310] sm:$0xff]
    %v329 = vld [vmem:[#allocation5 + $0x318] sm:$0xff]
    %v330 = vld [vmem:[#allocation5 + $0x320] sm:$0xff]
    %v331 = vld [vmem:[#allocation5 + $0x328] sm:$0xff]
    %v332 = vld [vmem:[#allocation5 + $0x330] sm:$0xff]
    %v333 = vld [vmem:[#allocation5 + $0x338] sm:$0xff]
    %v334 = vld [vmem:[#allocation5 + $0x340] sm:$0xff]
    %v335 = vld [vmem:[#allocation5 + $0x348] sm:$0xff]
    %v336 = vld [vmem:[#allocation5 + $0x350] sm:$0xff]
    %v337 = vld [vmem:[#allocation5 + $0x358] sm:$0xff]
    %v338 = vld [vmem:[#allocation5 + $0x360] sm:$0xff]
    %v339 = vld [vmem:[#allocation5 + $0x368] sm:$0xff]
    %v340 = vld [vmem:[#allocation5 + $0x370] sm:$0xff]
    %v341 = vld [vmem:[#allocation5 + $0x378] sm:$0xff]
    %v342 = vld [vmem:[%s2] sm:$0x3]
    %v344 = vlaneseq
    %v345 = vshrl.u32 %v344, 7
    %v346 = vsub.s32 0, %v345
    %v347 = vrot.slane %v342, %v346
    %v348 = vlaneseq
    %v349 = vshrl.u32 %v348, 7
    %v350 = vsub.s32 1, %v349
    %v351 = vrot.slane %v342, %v350
    %v482 = vunpack.c.l.b16 %v102
    %v483 = vunpack.c.h.b16 %v102
    %v484 = vunpack.c.l.b16 %v103
    %v485 = vunpack.c.h.b16 %v103
    %v486 = vunpack.c.l.b16 %v104
    %v487 = vunpack.c.h.b16 %v104
    %v488 = vunpack.c.l.b16 %v105
    %v489 = vunpack.c.l.b16 %v106
    %v490 = vunpack.c.h.b16 %v106
    %v491 = vunpack.c.l.b16 %v107
    %v492 = vunpack.c.h.b16 %v107
    %v493 = vunpack.c.l.b16 %v108
    %v494 = vunpack.c.h.b16 %v108
    %v495 = vunpack.c.l.b16 %v109
    %v496 = vunpack.c.l.b16 %v110
    %v497 = vunpack.c.h.b16 %v110
    %v498 = vunpack.c.l.b16 %v111
    %v499 = vunpack.c.h.b16 %v111
    %v500 = vunpack.c.l.b16 %v112
    %v501 = vunpack.c.h.b16 %v112
    %v502 = vunpack.c.l.b16 %v113
    %v503 = vunpack.c.l.b16 %v114
    %v504 = vunpack.c.h.b16 %v114
    %v505 = vunpack.c.l.b16 %v115
    %v506 = vunpack.c.h.b16 %v115
    %v507 = vunpack.c.l.b16 %v116
    %v508 = vunpack.c.h.b16 %v116
    %v509 = vunpack.c.l.b16 %v117
    %v510 = vunpack.c.l.b16 %v118
    %v511 = vunpack.c.h.b16 %v118
    %v512 = vunpack.c.l.b16 %v119
    %v513 = vunpack.c.h.b16 %v119
    %v514 = vunpack.c.l.b16 %v120
    %v515 = vunpack.c.h.b16 %v120
    %v516 = vunpack.c.l.b16 %v121
    %v517 = vunpack.c.l.b16 %v122
    %v518 = vunpack.c.h.b16 %v122
    %v519 = vunpack.c.l.b16 %v123
    %v520 = vunpack.c.h.b16 %v123
    %v521 = vunpack.c.l.b16 %v124
    %v522 = vunpack.c.h.b16 %v124
    %v523 = vunpack.c.l.b16 %v125
    %v524 = vunpack.c.l.b16 %v126
    %v525 = vunpack.c.h.b16 %v126
    %v526 = vunpack.c.l.b16 %v127
    %v527 = vunpack.c.h.b16 %v127
    %v528 = vunpack.c.l.b16 %v128
    %v529 = vunpack.c.h.b16 %v128
    %v530 = vunpack.c.l.b16 %v129
    %v531 = vunpack.c.l.b16 %v130
    %v532 = vunpack.c.h.b16 %v130
    %v533 = vunpack.c.l.b16 %v131
    %v534 = vunpack.c.h.b16 %v131
    %v535 = vunpack.c.l.b16 %v132
    %v536 = vunpack.c.h.b16 %v132
    %v537 = vunpack.c.l.b16 %v133
    %v538 = vunpack.c.l.b16 %v134
    %v539 = vunpack.c.h.b16 %v134
    %v540 = vunpack.c.l.b16 %v135
    %v541 = vunpack.c.h.b16 %v135
    %v542 = vunpack.c.l.b16 %v136
    %v543 = vunpack.c.h.b16 %v136
    %v544 = vunpack.c.l.b16 %v137
    %v545 = vunpack.c.l.b16 %v138
    %v546 = vunpack.c.h.b16 %v138
    %v547 = vunpack.c.l.b16 %v139
    %v548 = vunpack.c.h.b16 %v139
    %v549 = vunpack.c.l.b16 %v140
    %v550 = vunpack.c.h.b16 %v140
    %v551 = vunpack.c.l.b16 %v141
    %v552 = vunpack.c.l.b16 %v142
    %v553 = vunpack.c.h.b16 %v142
    %v554 = vunpack.c.l.b16 %v143
    %v555 = vunpack.c.h.b16 %v143
    %v556 = vunpack.c.l.b16 %v144
    %v557 = vunpack.c.h.b16 %v144
    %v558 = vunpack.c.l.b16 %v145
    %v559 = vunpack.c.l.b16 %v146
    %v560 = vunpack.c.h.b16 %v146
    %v561 = vunpack.c.l.b16 %v147
    %v562 = vunpack.c.h.b16 %v147
    %v563 = vunpack.c.l.b16 %v148
    %v564 = vunpack.c.h.b16 %v148
    %v565 = vunpack.c.l.b16 %v149
    %v566 = vunpack.c.l.b16 %v150
    %v567 = vunpack.c.h.b16 %v150
    %v568 = vunpack.c.l.b16 %v151
    %v569 = vunpack.c.h.b16 %v151
    %v570 = vunpack.c.l.b16 %v152
    %v571 = vunpack.c.h.b16 %v152
    %v572 = vunpack.c.l.b16 %v153
    %v573 = vunpack.c.l.b16 %v154
    %v574 = vunpack.c.h.b16 %v154
    %v575 = vunpack.c.l.b16 %v155
    %v576 = vunpack.c.h.b16 %v155
    %v577 = vunpack.c.l.b16 %v156
    %v578 = vunpack.c.h.b16 %v156
    %v579 = vunpack.c.l.b16 %v157
    %v580 = vunpack.c.l.b16 %v158
    %v581 = vunpack.c.h.b16 %v158
    %v582 = vunpack.c.l.b16 %v159
    %v583 = vunpack.c.h.b16 %v159
    %v584 = vunpack.c.l.b16 %v160
    %v585 = vunpack.c.h.b16 %v160
    %v586 = vunpack.c.l.b16 %v161
    %v587 = vunpack.c.l.b16 %v162
    %v588 = vunpack.c.h.b16 %v162
    %v589 = vunpack.c.l.b16 %v163
    %v590 = vunpack.c.h.b16 %v163
    %v591 = vunpack.c.l.b16 %v164
    %v592 = vunpack.c.h.b16 %v164
    %v593 = vunpack.c.l.b16 %v165
    %v594 = vunpack.c.l.b16 %v166
    %v595 = vunpack.c.h.b16 %v166
    %v596 = vunpack.c.l.b16 %v167
    %v597 = vunpack.c.h.b16 %v167
    %v598 = vunpack.c.l.b16 %v168
    %v599 = vunpack.c.h.b16 %v168
    %v600 = vunpack.c.l.b16 %v169
    %v601 = vunpack.c.l.b16 %v170
    %v602 = vunpack.c.h.b16 %v170
    %v603 = vunpack.c.l.b16 %v171
    %v604 = vunpack.c.h.b16 %v171
    %v605 = vunpack.c.l.b16 %v172
    %v606 = vunpack.c.h.b16 %v172
    %v607 = vunpack.c.l.b16 %v173
    %v608 = vunpack.c.l.b16 %v174
    %v609 = vunpack.c.h.b16 %v174
    %v610 = vunpack.c.l.b16 %v175
    %v611 = vunpack.c.h.b16 %v175
    %v612 = vunpack.c.l.b16 %v176
    %v613 = vunpack.c.h.b16 %v176
    %v614 = vunpack.c.l.b16 %v177
    %v615 = vunpack.c.l.b16 %v178
    %v616 = vunpack.c.h.b16 %v178
    %v617 = vunpack.c.l.b16 %v179
    %v618 = vunpack.c.h.b16 %v179
    %v619 = vunpack.c.l.b16 %v180
    %v620 = vunpack.c.h.b16 %v180
    %v621 = vunpack.c.l.b16 %v181
    %v622 = vunpack.c.l.b16 %v182
    %v623 = vunpack.c.h.b16 %v182
    %v624 = vunpack.c.l.b16 %v183
    %v625 = vunpack.c.h.b16 %v183
    %v626 = vunpack.c.l.b16 %v184
    %v627 = vunpack.c.h.b16 %v184
    %v628 = vunpack.c.l.b16 %v185
    %v629 = vunpack.c.l.b16 %v186
    %v630 = vunpack.c.h.b16 %v186
    %v631 = vunpack.c.l.b16 %v187
    %v632 = vunpack.c.h.b16 %v187
    %v633 = vunpack.c.l.b16 %v188
    %v634 = vunpack.c.h.b16 %v188
    %v635 = vunpack.c.l.b16 %v189
    %v636 = vunpack.c.l.b16 %v190
    %v637 = vunpack.c.h.b16 %v190
    %v638 = vunpack.c.l.b16 %v191
    %v639 = vunpack.c.h.b16 %v191
    %v640 = vunpack.c.l.b16 %v192
    %v641 = vunpack.c.h.b16 %v192
    %v642 = vunpack.c.l.b16 %v193
    %v643 = vunpack.c.l.b16 %v194
    %v644 = vunpack.c.h.b16 %v194
    %v645 = vunpack.c.l.b16 %v195
    %v646 = vunpack.c.h.b16 %v195
    %v647 = vunpack.c.l.b16 %v196
    %v648 = vunpack.c.h.b16 %v196
    %v649 = vunpack.c.l.b16 %v197
    %v650 = vunpack.c.l.b16 %v198
    %v651 = vunpack.c.h.b16 %v198
    %v652 = vunpack.c.l.b16 %v199
    %v653 = vunpack.c.h.b16 %v199
    %v654 = vunpack.c.l.b16 %v200
    %v655 = vunpack.c.h.b16 %v200
    %v656 = vunpack.c.l.b16 %v201
    %v657 = vunpack.c.l.b16 %v202
    %v658 = vunpack.c.h.b16 %v202
    %v659 = vunpack.c.l.b16 %v203
    %v660 = vunpack.c.h.b16 %v203
    %v661 = vunpack.c.l.b16 %v204
    %v662 = vunpack.c.h.b16 %v204
    %v663 = vunpack.c.l.b16 %v205
    %v664 = vunpack.c.l.b16 %v206
    %v665 = vunpack.c.h.b16 %v206
    %v666 = vunpack.c.l.b16 %v207
    %v667 = vunpack.c.h.b16 %v207
    %v668 = vunpack.c.l.b16 %v208
    %v669 = vunpack.c.h.b16 %v208
    %v670 = vunpack.c.l.b16 %v209
    %v671 = vunpack.c.l.b16 %v210
    %v672 = vunpack.c.h.b16 %v210
    %v673 = vunpack.c.l.b16 %v211
    %v674 = vunpack.c.h.b16 %v211
    %v675 = vunpack.c.l.b16 %v212
    %v676 = vunpack.c.h.b16 %v212
    %v677 = vunpack.c.l.b16 %v213
    %v678 = vunpack.c.l.b16 %v214
    %v679 = vunpack.c.h.b16 %v214
    %v680 = vunpack.c.l.b16 %v215
    %v681 = vunpack.c.h.b16 %v215
    %v682 = vunpack.c.l.b16 %v216
    %v683 = vunpack.c.h.b16 %v216
    %v684 = vunpack.c.l.b16 %v217
    %v685 = vunpack.c.l.b16 %v218
    %v686 = vunpack.c.h.b16 %v218
    %v687 = vunpack.c.l.b16 %v219
    %v688 = vunpack.c.h.b16 %v219
    %v689 = vunpack.c.l.b16 %v220
    %v690 = vunpack.c.h.b16 %v220
    %v691 = vunpack.c.l.b16 %v221
    %v692 = vunpack.c.l.b16 %v222
    %v693 = vunpack.c.h.b16 %v222
    %v694 = vunpack.c.l.b16 %v223
    %v695 = vunpack.c.h.b16 %v223
    %v696 = vunpack.c.l.b16 %v224
    %v697 = vunpack.c.h.b16 %v224
    %v698 = vunpack.c.l.b16 %v225
    %v699 = vunpack.c.l.b16 %v226
    %v700 = vunpack.c.h.b16 %v226
    %v701 = vunpack.c.l.b16 %v227
    %v702 = vunpack.c.h.b16 %v227
    %v703 = vunpack.c.l.b16 %v228
    %v704 = vunpack.c.h.b16 %v228
    %v705 = vunpack.c.l.b16 %v229
    %v706 = vpack.c.b16 %v489, %v482
    %v707 = vpack.c.b16 %v490, %v483
    %v708 = vpack.c.b16 %v491, %v484
    %v709 = vpack.c.b16 %v492, %v485
    %v710 = vpack.c.b16 %v493, %v486
    %v711 = vpack.c.b16 %v494, %v487
    %v712 = vpack.c.b16 %v495, %v488
    %v713 = vpack.c.b16 %v503, %v496
    %v714 = vpack.c.b16 %v504, %v497
    %v715 = vpack.c.b16 %v505, %v498
    %v716 = vpack.c.b16 %v506, %v499
    %v717 = vpack.c.b16 %v507, %v500
    %v718 = vpack.c.b16 %v508, %v501
    %v719 = vpack.c.b16 %v509, %v502
    %v720 = vpack.c.b16 %v517, %v510
    %v721 = vpack.c.b16 %v518, %v511
    %v722 = vpack.c.b16 %v519, %v512
    %v723 = vpack.c.b16 %v520, %v513
    %v724 = vpack.c.b16 %v521, %v514
    %v725 = vpack.c.b16 %v522, %v515
    %v726 = vpack.c.b16 %v523, %v516
    %v727 = vpack.c.b16 %v531, %v524
    %v728 = vpack.c.b16 %v532, %v525
    %v729 = vpack.c.b16 %v533, %v526
    %v730 = vpack.c.b16 %v534, %v527
    %v731 = vpack.c.b16 %v535, %v528
    %v732 = vpack.c.b16 %v536, %v529
    %v733 = vpack.c.b16 %v537, %v530
    %v734 = vpack.c.b16 %v545, %v538
    %v735 = vpack.c.b16 %v546, %v539
    %v736 = vpack.c.b16 %v547, %v540
    %v737 = vpack.c.b16 %v548, %v541
    %v738 = vpack.c.b16 %v549, %v542
    %v739 = vpack.c.b16 %v550, %v543
    %v740 = vpack.c.b16 %v551, %v544
    %v741 = vpack.c.b16 %v559, %v552
    %v742 = vpack.c.b16 %v560, %v553
    %v743 = vpack.c.b16 %v561, %v554
    %v744 = vpack.c.b16 %v562, %v555
    %v745 = vpack.c.b16 %v563, %v556
    %v746 = vpack.c.b16 %v564, %v557
    %v747 = vpack.c.b16 %v565, %v558
    %v748 = vpack.c.b16 %v573, %v566
    %v749 = vpack.c.b16 %v574, %v567
    %v750 = vpack.c.b16 %v575, %v568
    %v751 = vpack.c.b16 %v576, %v569
    %v752 = vpack.c.b16 %v577, %v570
    %v753 = vpack.c.b16 %v578, %v571
    %v754 = vpack.c.b16 %v579, %v572
    %v755 = vpack.c.b16 %v587, %v580
    %v756 = vpack.c.b16 %v588, %v581
    %v757 = vpack.c.b16 %v589, %v582
    %v758 = vpack.c.b16 %v590, %v583
    %v759 = vpack.c.b16 %v591, %v584
    %v760 = vpack.c.b16 %v592, %v585
    %v761 = vpack.c.b16 %v593, %v586
    %v762 = vpack.c.b16 %v601, %v594
    %v763 = vpack.c.b16 %v602, %v595
    %v764 = vpack.c.b16 %v603, %v596
    %v765 = vpack.c.b16 %v604, %v597
    %v766 = vpack.c.b16 %v605, %v598
    %v767 = vpack.c.b16 %v606, %v599
    %v768 = vpack.c.b16 %v607, %v600
    %v769 = vpack.c.b16 %v615, %v608
    %v770 = vpack.c.b16 %v616, %v609
    %v771 = vpack.c.b16 %v617, %v610
    %v772 = vpack.c.b16 %v618, %v611
    %v773 = vpack.c.b16 %v619, %v612
    %v774 = vpack.c.b16 %v620, %v613
    %v775 = vpack.c.b16 %v621, %v614
    %v776 = vpack.c.b16 %v629, %v622
    %v777 = vpack.c.b16 %v630, %v623
    %v778 = vpack.c.b16 %v631, %v624
    %v779 = vpack.c.b16 %v632, %v625
    %v780 = vpack.c.b16 %v633, %v626
    %v781 = vpack.c.b16 %v634, %v627
    %v782 = vpack.c.b16 %v635, %v628
    %v783 = vpack.c.b16 %v643, %v636
    %v784 = vpack.c.b16 %v644, %v637
    %v785 = vpack.c.b16 %v645, %v638
    %v786 = vpack.c.b16 %v646, %v639
    %v787 = vpack.c.b16 %v647, %v640
    %v788 = vpack.c.b16 %v648, %v641
    %v789 = vpack.c.b16 %v649, %v642
    %v790 = vpack.c.b16 %v657, %v650
    %v791 = vpack.c.b16 %v658, %v651
    %v792 = vpack.c.b16 %v659, %v652
    %v793 = vpack.c.b16 %v660, %v653
    %v794 = vpack.c.b16 %v661, %v654
    %v795 = vpack.c.b16 %v662, %v655
    %v796 = vpack.c.b16 %v663, %v656
    %v797 = vpack.c.b16 %v671, %v664
    %v798 = vpack.c.b16 %v672, %v665
    %v799 = vpack.c.b16 %v673, %v666
    %v800 = vpack.c.b16 %v674, %v667
    %v801 = vpack.c.b16 %v675, %v668
    %v802 = vpack.c.b16 %v676, %v669
    %v803 = vpack.c.b16 %v677, %v670
    %v804 = vpack.c.b16 %v685, %v678
    %v805 = vpack.c.b16 %v686, %v679
    %v806 = vpack.c.b16 %v687, %v680
    %v807 = vpack.c.b16 %v688, %v681
    %v808 = vpack.c.b16 %v689, %v682
    %v809 = vpack.c.b16 %v690, %v683
    %v810 = vpack.c.b16 %v691, %v684
    %v811 = vpack.c.b16 %v699, %v692
    %v812 = vpack.c.b16 %v700, %v693
    %v813 = vpack.c.b16 %v701, %v694
    %v814 = vpack.c.b16 %v702, %v695
    %v815 = vpack.c.b16 %v703, %v696
    %v816 = vpack.c.b16 %v704, %v697
    %v817 = vpack.c.b16 %v705, %v698
    %v1042 = vunpack.c.l.b16 %v230
    %v1043 = vunpack.c.h.b16 %v230
    %v1044 = vunpack.c.l.b16 %v231
    %v1045 = vunpack.c.h.b16 %v231
    %v1046 = vunpack.c.l.b16 %v232
    %v1047 = vunpack.c.h.b16 %v232
    %v1048 = vunpack.c.l.b16 %v233
    %v1049 = vunpack.c.h.b16 %v233
    %v1050 = vunpack.c.l.b16 %v234
    %v1051 = vunpack.c.h.b16 %v234
    %v1052 = vunpack.c.l.b16 %v235
    %v1053 = vunpack.c.h.b16 %v235
    %v1054 = vunpack.c.l.b16 %v236
    %v1055 = vunpack.c.h.b16 %v236
    %v1056 = vunpack.c.l.b16 %v237
    %v1057 = vunpack.c.h.b16 %v237
    %v1058 = vunpack.c.l.b16 %v238
    %v1059 = vunpack.c.h.b16 %v238
    %v1060 = vunpack.c.l.b16 %v239
    %v1061 = vunpack.c.h.b16 %v239
    %v1062 = vunpack.c.l.b16 %v240
    %v1063 = vunpack.c.h.b16 %v240
    %v1064 = vunpack.c.l.b16 %v241
    %v1065 = vunpack.c.h.b16 %v241
    %v1066 = vunpack.c.l.b16 %v242
    %v1067 = vunpack.c.h.b16 %v242
    %v1068 = vunpack.c.l.b16 %v243
    %v1069 = vunpack.c.h.b16 %v243
    %v1070 = vunpack.c.l.b16 %v244
    %v1071 = vunpack.c.h.b16 %v244
    %v1072 = vunpack.c.l.b16 %v245
    %v1073 = vunpack.c.h.b16 %v245
    %v1074 = vunpack.c.l.b16 %v246
    %v1075 = vunpack.c.h.b16 %v246
    %v1076 = vunpack.c.l.b16 %v247
    %v1077 = vunpack.c.h.b16 %v247
    %v1078 = vunpack.c.l.b16 %v248
    %v1079 = vunpack.c.h.b16 %v248
    %v1080 = vunpack.c.l.b16 %v249
    %v1081 = vunpack.c.h.b16 %v249
    %v1082 = vunpack.c.l.b16 %v250
    %v1083 = vunpack.c.h.b16 %v250
    %v1084 = vunpack.c.l.b16 %v251
    %v1085 = vunpack.c.h.b16 %v251
    %v1086 = vunpack.c.l.b16 %v252
    %v1087 = vunpack.c.h.b16 %v252
    %v1088 = vunpack.c.l.b16 %v253
    %v1089 = vunpack.c.h.b16 %v253
    %v1090 = vunpack.c.l.b16 %v254
    %v1091 = vunpack.c.h.b16 %v254
    %v1092 = vunpack.c.l.b16 %v255
    %v1093 = vunpack.c.h.b16 %v255
    %v1094 = vunpack.c.l.b16 %v256
    %v1095 = vunpack.c.h.b16 %v256
    %v1096 = vunpack.c.l.b16 %v257
    %v1097 = vunpack.c.h.b16 %v257
    %v1098 = vunpack.c.l.b16 %v258
    %v1099 = vunpack.c.h.b16 %v258
    %v1100 = vunpack.c.l.b16 %v259
    %v1101 = vunpack.c.h.b16 %v259
    %v1102 = vunpack.c.l.b16 %v260
    %v1103 = vunpack.c.h.b16 %v260
    %v1104 = vunpack.c.l.b16 %v261
    %v1105 = vunpack.c.h.b16 %v261
    %v1106 = vunpack.c.l.b16 %v262
    %v1107 = vunpack.c.h.b16 %v262
    %v1108 = vunpack.c.l.b16 %v263
    %v1109 = vunpack.c.h.b16 %v263
    %v1110 = vunpack.c.l.b16 %v264
    %v1111 = vunpack.c.h.b16 %v264
    %v1112 = vunpack.c.l.b16 %v265
    %v1113 = vunpack.c.h.b16 %v265
    %v1114 = vunpack.c.l.b16 %v266
    %v1115 = vunpack.c.h.b16 %v266
    %v1116 = vunpack.c.l.b16 %v267
    %v1117 = vunpack.c.h.b16 %v267
    %v1118 = vunpack.c.l.b16 %v268
    %v1119 = vunpack.c.h.b16 %v268
    %v1120 = vunpack.c.l.b16 %v269
    %v1121 = vunpack.c.h.b16 %v269
    %v1122 = vunpack.c.l.b16 %v270
    %v1123 = vunpack.c.h.b16 %v270
    %v1124 = vunpack.c.l.b16 %v271
    %v1125 = vunpack.c.h.b16 %v271
    %v1126 = vunpack.c.l.b16 %v272
    %v1127 = vunpack.c.h.b16 %v272
    %v1128 = vunpack.c.l.b16 %v273
    %v1129 = vunpack.c.h.b16 %v273
    %v1130 = vunpack.c.l.b16 %v274
    %v1131 = vunpack.c.h.b16 %v274
    %v1132 = vunpack.c.l.b16 %v275
    %v1133 = vunpack.c.h.b16 %v275
    %v1134 = vunpack.c.l.b16 %v276
    %v1135 = vunpack.c.h.b16 %v276
    %v1136 = vunpack.c.l.b16 %v277
    %v1137 = vunpack.c.h.b16 %v277
    %v1138 = vunpack.c.l.b16 %v278
    %v1139 = vunpack.c.h.b16 %v278
    %v1140 = vunpack.c.l.b16 %v279
    %v1141 = vunpack.c.h.b16 %v279
    %v1142 = vunpack.c.l.b16 %v280
    %v1143 = vunpack.c.h.b16 %v280
    %v1144 = vunpack.c.l.b16 %v281
    %v1145 = vunpack.c.h.b16 %v281
    %v1146 = vunpack.c.l.b16 %v282
    %v1147 = vunpack.c.h.b16 %v282
    %v1148 = vunpack.c.l.b16 %v283
    %v1149 = vunpack.c.h.b16 %v283
    %v1150 = vunpack.c.l.b16 %v284
    %v1151 = vunpack.c.h.b16 %v284
    %v1152 = vunpack.c.l.b16 %v285
    %v1153 = vunpack.c.h.b16 %v285
    %v1154 = vunpack.c.l.b16 %v286
    %v1155 = vunpack.c.h.b16 %v286
    %v1156 = vunpack.c.l.b16 %v287
    %v1157 = vunpack.c.h.b16 %v287
    %v1158 = vunpack.c.l.b16 %v288
    %v1159 = vunpack.c.h.b16 %v288
    %v1160 = vunpack.c.l.b16 %v289
    %v1161 = vunpack.c.h.b16 %v289
    %v1162 = vunpack.c.l.b16 %v290
    %v1163 = vunpack.c.h.b16 %v290
    %v1164 = vunpack.c.l.b16 %v291
    %v1165 = vunpack.c.h.b16 %v291
    %v1166 = vunpack.c.l.b16 %v292
    %v1167 = vunpack.c.h.b16 %v292
    %v1168 = vunpack.c.l.b16 %v293
    %v1169 = vunpack.c.h.b16 %v293
    %v1170 = vunpack.c.l.b16 %v294
    %v1171 = vunpack.c.h.b16 %v294
    %v1172 = vunpack.c.l.b16 %v295
    %v1173 = vunpack.c.h.b16 %v295
    %v1174 = vunpack.c.l.b16 %v296
    %v1175 = vunpack.c.h.b16 %v296
    %v1176 = vunpack.c.l.b16 %v297
    %v1177 = vunpack.c.h.b16 %v297
    %v1178 = vunpack.c.l.b16 %v298
    %v1179 = vunpack.c.h.b16 %v298
    %v1180 = vunpack.c.l.b16 %v299
    %v1181 = vunpack.c.h.b16 %v299
    %v1182 = vunpack.c.l.b16 %v300
    %v1183 = vunpack.c.h.b16 %v300
    %v1184 = vunpack.c.l.b16 %v301
    %v1185 = vunpack.c.h.b16 %v301
    %v1186 = vunpack.c.l.b16 %v302
    %v1187 = vunpack.c.h.b16 %v302
    %v1188 = vunpack.c.l.b16 %v303
    %v1189 = vunpack.c.h.b16 %v303
    %v1190 = vunpack.c.l.b16 %v304
    %v1191 = vunpack.c.h.b16 %v304
    %v1192 = vunpack.c.l.b16 %v305
    %v1193 = vunpack.c.h.b16 %v305
    %v1194 = vunpack.c.l.b16 %v306
    %v1195 = vunpack.c.h.b16 %v306
    %v1196 = vunpack.c.l.b16 %v307
    %v1197 = vunpack.c.h.b16 %v307
    %v1198 = vunpack.c.l.b16 %v308
    %v1199 = vunpack.c.h.b16 %v308
    %v1200 = vunpack.c.l.b16 %v309
    %v1201 = vunpack.c.h.b16 %v309
    %v1202 = vunpack.c.l.b16 %v310
    %v1203 = vunpack.c.h.b16 %v310
    %v1204 = vunpack.c.l.b16 %v311
    %v1205 = vunpack.c.h.b16 %v311
    %v1206 = vunpack.c.l.b16 %v312
    %v1207 = vunpack.c.h.b16 %v312
    %v1208 = vunpack.c.l.b16 %v313
    %v1209 = vunpack.c.h.b16 %v313
    %v1210 = vunpack.c.l.b16 %v314
    %v1211 = vunpack.c.h.b16 %v314
    %v1212 = vunpack.c.l.b16 %v315
    %v1213 = vunpack.c.h.b16 %v315
    %v1214 = vunpack.c.l.b16 %v316
    %v1215 = vunpack.c.h.b16 %v316
    %v1216 = vunpack.c.l.b16 %v317
    %v1217 = vunpack.c.h.b16 %v317
    %v1218 = vunpack.c.l.b16 %v318
    %v1219 = vunpack.c.h.b16 %v318
    %v1220 = vunpack.c.l.b16 %v319
    %v1221 = vunpack.c.h.b16 %v319
    %v1222 = vunpack.c.l.b16 %v320
    %v1223 = vunpack.c.h.b16 %v320
    %v1224 = vunpack.c.l.b16 %v321
    %v1225 = vunpack.c.h.b16 %v321
    %v1226 = vunpack.c.l.b16 %v322
    %v1227 = vunpack.c.h.b16 %v322
    %v1228 = vunpack.c.l.b16 %v323
    %v1229 = vunpack.c.h.b16 %v323
    %v1230 = vunpack.c.l.b16 %v324
    %v1231 = vunpack.c.h.b16 %v324
    %v1232 = vunpack.c.l.b16 %v325
    %v1233 = vunpack.c.h.b16 %v325
    %v1234 = vunpack.c.l.b16 %v326
    %v1235 = vunpack.c.h.b16 %v326
    %v1236 = vunpack.c.l.b16 %v327
    %v1237 = vunpack.c.h.b16 %v327
    %v1238 = vunpack.c.l.b16 %v328
    %v1239 = vunpack.c.h.b16 %v328
    %v1240 = vunpack.c.l.b16 %v329
    %v1241 = vunpack.c.h.b16 %v329
    %v1242 = vunpack.c.l.b16 %v330
    %v1243 = vunpack.c.h.b16 %v330
    %v1244 = vunpack.c.l.b16 %v331
    %v1245 = vunpack.c.h.b16 %v331
    %v1246 = vunpack.c.l.b16 %v332
    %v1247 = vunpack.c.h.b16 %v332
    %v1248 = vunpack.c.l.b16 %v333
    %v1249 = vunpack.c.h.b16 %v333
    %v1250 = vunpack.c.l.b16 %v334
    %v1251 = vunpack.c.h.b16 %v334
    %v1252 = vunpack.c.l.b16 %v335
    %v1253 = vunpack.c.h.b16 %v335
    %v1254 = vunpack.c.l.b16 %v336
    %v1255 = vunpack.c.h.b16 %v336
    %v1256 = vunpack.c.l.b16 %v337
    %v1257 = vunpack.c.h.b16 %v337
    %v1258 = vunpack.c.l.b16 %v338
    %v1259 = vunpack.c.h.b16 %v338
    %v1260 = vunpack.c.l.b16 %v339
    %v1261 = vunpack.c.h.b16 %v339
    %v1262 = vunpack.c.l.b16 %v340
    %v1263 = vunpack.c.h.b16 %v340
    %v1264 = vunpack.c.l.b16 %v341
    %v1265 = vunpack.c.h.b16 %v341
    %v1266 = vpack.c.b16 %v1044, %v1042
    %v1267 = vpack.c.b16 %v1045, %v1043
    %v1268 = vpack.c.b16 %v1048, %v1046
    %v1269 = vpack.c.b16 %v1049, %v1047
    %v1270 = vpack.c.b16 %v1052, %v1050
    %v1271 = vpack.c.b16 %v1053, %v1051
    %v1272 = vpack.c.b16 %v1056, %v1054
    %v1273 = vpack.c.b16 %v1057, %v1055
    %v1274 = vpack.c.b16 %v1060, %v1058
    %v1275 = vpack.c.b16 %v1061, %v1059
    %v1276 = vpack.c.b16 %v1064, %v1062
    %v1277 = vpack.c.b16 %v1065, %v1063
    %v1278 = vpack.c.b16 %v1068, %v1066
    %v1279 = vpack.c.b16 %v1069, %v1067
    %v1280 = vpack.c.b16 %v1072, %v1070
    %v1281 = vpack.c.b16 %v1073, %v1071
    %v1282 = vpack.c.b16 %v1076, %v1074
    %v1283 = vpack.c.b16 %v1077, %v1075
    %v1284 = vpack.c.b16 %v1080, %v1078
    %v1285 = vpack.c.b16 %v1081, %v1079
    %v1286 = vpack.c.b16 %v1084, %v1082
    %v1287 = vpack.c.b16 %v1085, %v1083
    %v1288 = vpack.c.b16 %v1088, %v1086
    %v1289 = vpack.c.b16 %v1089, %v1087
    %v1290 = vpack.c.b16 %v1092, %v1090
    %v1291 = vpack.c.b16 %v1093, %v1091
    %v1292 = vpack.c.b16 %v1096, %v1094
    %v1293 = vpack.c.b16 %v1097, %v1095
    %v1294 = vpack.c.b16 %v1100, %v1098
    %v1295 = vpack.c.b16 %v1101, %v1099
    %v1296 = vpack.c.b16 %v1104, %v1102
    %v1297 = vpack.c.b16 %v1105, %v1103
    %v1298 = vpack.c.b16 %v1108, %v1106
    %v1299 = vpack.c.b16 %v1109, %v1107
    %v1300 = vpack.c.b16 %v1112, %v1110
    %v1301 = vpack.c.b16 %v1113, %v1111
    %v1302 = vpack.c.b16 %v1116, %v1114
    %v1303 = vpack.c.b16 %v1117, %v1115
    %v1304 = vpack.c.b16 %v1120, %v1118
    %v1305 = vpack.c.b16 %v1121, %v1119
    %v1306 = vpack.c.b16 %v1124, %v1122
    %v1307 = vpack.c.b16 %v1125, %v1123
    %v1308 = vpack.c.b16 %v1128, %v1126
    %v1309 = vpack.c.b16 %v1129, %v1127
    %v1310 = vpack.c.b16 %v1132, %v1130
    %v1311 = vpack.c.b16 %v1133, %v1131
    %v1312 = vpack.c.b16 %v1136, %v1134
    %v1313 = vpack.c.b16 %v1137, %v1135
    %v1314 = vpack.c.b16 %v1140, %v1138
    %v1315 = vpack.c.b16 %v1141, %v1139
    %v1316 = vpack.c.b16 %v1144, %v1142
    %v1317 = vpack.c.b16 %v1145, %v1143
    %v1318 = vpack.c.b16 %v1148, %v1146
    %v1319 = vpack.c.b16 %v1149, %v1147
    %v1320 = vpack.c.b16 %v1152, %v1150
    %v1321 = vpack.c.b16 %v1153, %v1151
    %v1322 = vpack.c.b16 %v1156, %v1154
    %v1323 = vpack.c.b16 %v1157, %v1155
    %v1324 = vpack.c.b16 %v1160, %v1158
    %v1325 = vpack.c.b16 %v1161, %v1159
    %v1326 = vpack.c.b16 %v1164, %v1162
    %v1327 = vpack.c.b16 %v1165, %v1163
    %v1328 = vpack.c.b16 %v1168, %v1166
    %v1329 = vpack.c.b16 %v1169, %v1167
    %v1330 = vpack.c.b16 %v1172, %v1170
    %v1331 = vpack.c.b16 %v1173, %v1171
    %v1332 = vpack.c.b16 %v1176, %v1174
    %v1333 = vpack.c.b16 %v1177, %v1175
    %v1334 = vpack.c.b16 %v1180, %v1178
    %v1335 = vpack.c.b16 %v1181, %v1179
    %v1336 = vpack.c.b16 %v1184, %v1182
    %v1337 = vpack.c.b16 %v1185, %v1183
    %v1338 = vpack.c.b16 %v1188, %v1186
    %v1339 = vpack.c.b16 %v1189, %v1187
    %v1340 = vpack.c.b16 %v1192, %v1190
    %v1341 = vpack.c.b16 %v1193, %v1191
    %v1342 = vpack.c.b16 %v1196, %v1194
    %v1343 = vpack.c.b16 %v1197, %v1195
    %v1344 = vpack.c.b16 %v1200, %v1198
    %v1345 = vpack.c.b16 %v1201, %v1199
    %v1346 = vpack.c.b16 %v1204, %v1202
    %v1347 = vpack.c.b16 %v1205, %v1203
    %v1348 = vpack.c.b16 %v1208, %v1206
    %v1349 = vpack.c.b16 %v1209, %v1207
    %v1350 = vpack.c.b16 %v1212, %v1210
    %v1351 = vpack.c.b16 %v1213, %v1211
    %v1352 = vpack.c.b16 %v1216, %v1214
    %v1353 = vpack.c.b16 %v1217, %v1215
    %v1354 = vpack.c.b16 %v1220, %v1218
    %v1355 = vpack.c.b16 %v1221, %v1219
    %v1356 = vpack.c.b16 %v1224, %v1222
    %v1357 = vpack.c.b16 %v1225, %v1223
    %v1358 = vpack.c.b16 %v1228, %v1226
    %v1359 = vpack.c.b16 %v1229, %v1227
    %v1360 = vpack.c.b16 %v1232, %v1230
    %v1361 = vpack.c.b16 %v1233, %v1231
    %v1362 = vpack.c.b16 %v1236, %v1234
    %v1363 = vpack.c.b16 %v1237, %v1235
    %v1364 = vpack.c.b16 %v1240, %v1238
    %v1365 = vpack.c.b16 %v1241, %v1239
    %v1366 = vpack.c.b16 %v1244, %v1242
    %v1367 = vpack.c.b16 %v1245, %v1243
    %v1368 = vpack.c.b16 %v1248, %v1246
    %v1369 = vpack.c.b16 %v1249, %v1247
    %v1370 = vpack.c.b16 %v1252, %v1250
    %v1371 = vpack.c.b16 %v1253, %v1251
    %v1372 = vpack.c.b16 %v1256, %v1254
    %v1373 = vpack.c.b16 %v1257, %v1255
    %v1374 = vpack.c.b16 %v1260, %v1258
    %v1375 = vpack.c.b16 %v1261, %v1259
    %v1376 = vpack.c.b16 %v1264, %v1262
    %v1377 = vpack.c.b16 %v1265, %v1263
    %1490 = vmatprep.subr.bf16.mxu0 %v1281
    %1491 = vmatpush1.bf16.msra.mxu0 %v1280
    %1492 = vmatprep.subr.bf16.mxu0 %v1279
    %1493 = vmatpush1.bf16.msra.mxu0 %v1278
    %1494 = vmatprep.subr.bf16.mxu0 %v1277
    %1495 = vmatpush1.bf16.msra.mxu0 %v1276
    %1496 = vmatprep.subr.bf16.mxu0 %v1275
    %1497 = vmatpush1.bf16.msra.mxu0 %v1274
    %1498 = vmatprep.subr.bf16.mxu0 %v1273
    %1499 = vmatpush1.bf16.msra.mxu0 %v1272
    %1500 = vmatprep.subr.bf16.mxu0 %v1271
    %1501 = vmatpush1.bf16.msra.mxu0 %v1270
    %1502 = vmatprep.subr.bf16.mxu0 %v1269
    %1503 = vmatpush1.bf16.msra.mxu0 %v1268
    %1504 = vmatprep.subr.bf16.mxu0 %v1267
    %1505 = vmatpush1.bf16.msra.mxu0 %v1266
    %1506 = vmatprep.subr.bf16.mxu0 %v1297
    %1507 = vmatpush2.bf16.msra.mxu0 %v1296
    %1508 = vmatprep.subr.bf16.mxu0 %v1295
    %1509 = vmatpush2.bf16.msra.mxu0 %v1294
    %1510 = vmatprep.subr.bf16.mxu0 %v1293
    %1511 = vmatpush2.bf16.msra.mxu0 %v1292
    %1512 = vmatprep.subr.bf16.mxu0 %v1291
    %1513 = vmatpush2.bf16.msra.mxu0 %v1290
    %1514 = vmatprep.subr.bf16.mxu0 %v1289
    %1515 = vmatpush2.bf16.msra.mxu0 %v1288
    %1516 = vmatprep.subr.bf16.mxu0 %v1287
    %1517 = vmatpush2.bf16.msra.mxu0 %v1286
    %1518 = vmatprep.subr.bf16.mxu0 %v1285
    %1519 = vmatpush2.bf16.msra.mxu0 %v1284
    %1520 = vmatprep.subr.bf16.mxu0 %v1283
    %1521 = vmatpush2.bf16.msra.mxu0 %v1282
    %1522 = vmatprep.mubr.bf16.mxu0 %v707
    %1523 = vmatmul.mubr.bf16.gmra.mxu0 %v706
    %v1524 = vpop.f32.mrf.mxu0
    %v1525 = vadd.f32 %v347, %v1524
    %v1526 = vpop.f32.mrf.mxu0
    %v1527 = vadd.f32 %v351, %v1526
    %v1528 = vpop.f32.mrf.mxu0
    %v1529 = vadd.f32 %v347, %v1528
    %v1530 = vpop.f32.mrf.mxu0
    %v1531 = vadd.f32 %v351, %v1530
    %1532 = vmatprep.mubr.bf16.mxu0 %v714
    %1533 = vmatmul.mubr.bf16.gmra.mxu0 %v713
    %v1534 = vpop.f32.mrf.mxu0
    %v1535 = vadd.f32 %v347, %v1534
    %v1536 = vpop.f32.mrf.mxu0
    %v1537 = vadd.f32 %v351, %v1536
    %v1538 = vpop.f32.mrf.mxu0
    %v1539 = vadd.f32 %v347, %v1538
    %v1540 = vpop.f32.mrf.mxu0
    %v1541 = vadd.f32 %v351, %v1540
    %1542 = vmatprep.mubr.bf16.mxu0 %v721
    %1543 = vmatmul.mubr.bf16.gmra.mxu0 %v720
    %v1544 = vpop.f32.mrf.mxu0
    %v1545 = vadd.f32 %v347, %v1544
    %v1546 = vpop.f32.mrf.mxu0
    %v1547 = vadd.f32 %v351, %v1546
    %v1548 = vpop.f32.mrf.mxu0
    %v1549 = vadd.f32 %v347, %v1548
    %v1550 = vpop.f32.mrf.mxu0
    %v1551 = vadd.f32 %v351, %v1550
    %1552 = vmatprep.mubr.bf16.mxu0 %v728
    %1553 = vmatmul.mubr.bf16.gmra.mxu0 %v727
    %v1554 = vpop.f32.mrf.mxu0
    %v1555 = vadd.f32 %v347, %v1554
    %v1556 = vpop.f32.mrf.mxu0
    %v1557 = vadd.f32 %v351, %v1556
    %v1558 = vpop.f32.mrf.mxu0
    %v1559 = vadd.f32 %v347, %v1558
    %v1560 = vpop.f32.mrf.mxu0
    %v1561 = vadd.f32 %v351, %v1560
    %1562 = vmatprep.mubr.bf16.mxu0 %v735
    %1563 = vmatmul.mubr.bf16.gmra.mxu0 %v734
    %v1564 = vpop.f32.mrf.mxu0
    %v1565 = vadd.f32 %v347, %v1564
    %v1566 = vpop.f32.mrf.mxu0
    %v1567 = vadd.f32 %v351, %v1566
    %v1568 = vpop.f32.mrf.mxu0
    %v1569 = vadd.f32 %v347, %v1568
    %v1570 = vpop.f32.mrf.mxu0
    %v1571 = vadd.f32 %v351, %v1570
    %1572 = vmatprep.mubr.bf16.mxu0 %v742
    %1573 = vmatmul.mubr.bf16.gmra.mxu0 %v741
    %v1574 = vpop.f32.mrf.mxu0
    %v1575 = vadd.f32 %v347, %v1574
    %v1576 = vpop.f32.mrf.mxu0
    %v1577 = vadd.f32 %v351, %v1576
    %v1578 = vpop.f32.mrf.mxu0
    %v1579 = vadd.f32 %v347, %v1578
    %v1580 = vpop.f32.mrf.mxu0
    %v1581 = vadd.f32 %v351, %v1580
    %1582 = vmatprep.mubr.bf16.mxu0 %v749
    %1583 = vmatmul.mubr.bf16.gmra.mxu0 %v748
    %v1584 = vpop.f32.mrf.mxu0
    %v1585 = vadd.f32 %v347, %v1584
    %v1586 = vpop.f32.mrf.mxu0
    %v1587 = vadd.f32 %v351, %v1586
    %v1588 = vpop.f32.mrf.mxu0
    %v1589 = vadd.f32 %v347, %v1588
    %v1590 = vpop.f32.mrf.mxu0
    %v1591 = vadd.f32 %v351, %v1590
    %1592 = vmatprep.mubr.bf16.mxu0 %v756
    %1593 = vmatmul.mubr.bf16.gmra.mxu0 %v755
    %v1594 = vpop.f32.mrf.mxu0
    %v1595 = vadd.f32 %v347, %v1594
    %v1596 = vpop.f32.mrf.mxu0
    %v1597 = vadd.f32 %v351, %v1596
    %v1598 = vpop.f32.mrf.mxu0
    %v1599 = vadd.f32 %v347, %v1598
    %v1600 = vpop.f32.mrf.mxu0
    %v1601 = vadd.f32 %v351, %v1600
    %1602 = vmatprep.mubr.bf16.mxu0 %v763
    %1603 = vmatmul.mubr.bf16.gmra.mxu0 %v762
    %v1604 = vpop.f32.mrf.mxu0
    %v1605 = vadd.f32 %v347, %v1604
    %v1606 = vpop.f32.mrf.mxu0
    %v1607 = vadd.f32 %v351, %v1606
    %v1608 = vpop.f32.mrf.mxu0
    %v1609 = vadd.f32 %v347, %v1608
    %v1610 = vpop.f32.mrf.mxu0
    %v1611 = vadd.f32 %v351, %v1610
    %1612 = vmatprep.mubr.bf16.mxu0 %v770
    %1613 = vmatmul.mubr.bf16.gmra.mxu0 %v769
    %v1614 = vpop.f32.mrf.mxu0
    %v1615 = vadd.f32 %v347, %v1614
    %v1616 = vpop.f32.mrf.mxu0
    %v1617 = vadd.f32 %v351, %v1616
    %v1618 = vpop.f32.mrf.mxu0
    %v1619 = vadd.f32 %v347, %v1618
    %v1620 = vpop.f32.mrf.mxu0
    %v1621 = vadd.f32 %v351, %v1620
    %1622 = vmatprep.mubr.bf16.mxu0 %v777
    %1623 = vmatmul.mubr.bf16.gmra.mxu0 %v776
    %v1624 = vpop.f32.mrf.mxu0
    %v1625 = vadd.f32 %v347, %v1624
    %v1626 = vpop.f32.mrf.mxu0
    %v1627 = vadd.f32 %v351, %v1626
    %v1628 = vpop.f32.mrf.mxu0
    %v1629 = vadd.f32 %v347, %v1628
    %v1630 = vpop.f32.mrf.mxu0
    %v1631 = vadd.f32 %v351, %v1630
    %1632 = vmatprep.mubr.bf16.mxu0 %v784
    %1633 = vmatmul.mubr.bf16.gmra.mxu0 %v783
    %v1634 = vpop.f32.mrf.mxu0
    %v1635 = vadd.f32 %v347, %v1634
    %v1636 = vpop.f32.mrf.mxu0
    %v1637 = vadd.f32 %v351, %v1636
    %v1638 = vpop.f32.mrf.mxu0
    %v1639 = vadd.f32 %v347, %v1638
    %v1640 = vpop.f32.mrf.mxu0
    %v1641 = vadd.f32 %v351, %v1640
    %1642 = vmatprep.mubr.bf16.mxu0 %v791
    %1643 = vmatmul.mubr.bf16.gmra.mxu0 %v790
    %v1644 = vpop.f32.mrf.mxu0
    %v1645 = vadd.f32 %v347, %v1644
    %v1646 = vpop.f32.mrf.mxu0
    %v1647 = vadd.f32 %v351, %v1646
    %v1648 = vpop.f32.mrf.mxu0
    %v1649 = vadd.f32 %v347, %v1648
    %v1650 = vpop.f32.mrf.mxu0
    %v1651 = vadd.f32 %v351, %v1650
    %1652 = vmatprep.mubr.bf16.mxu0 %v798
    %1653 = vmatmul.mubr.bf16.gmra.mxu0 %v797
    %v1654 = vpop.f32.mrf.mxu0
    %v1655 = vadd.f32 %v347, %v1654
    %v1656 = vpop.f32.mrf.mxu0
    %v1657 = vadd.f32 %v351, %v1656
    %v1658 = vpop.f32.mrf.mxu0
    %v1659 = vadd.f32 %v347, %v1658
    %v1660 = vpop.f32.mrf.mxu0
    %v1661 = vadd.f32 %v351, %v1660
    %1662 = vmatprep.mubr.bf16.mxu0 %v805
    %1663 = vmatmul.mubr.bf16.gmra.mxu0 %v804
    %v1664 = vpop.f32.mrf.mxu0
    %v1665 = vadd.f32 %v347, %v1664
    %v1666 = vpop.f32.mrf.mxu0
    %v1667 = vadd.f32 %v351, %v1666
    %v1668 = vpop.f32.mrf.mxu0
    %v1669 = vadd.f32 %v347, %v1668
    %v1670 = vpop.f32.mrf.mxu0
    %v1671 = vadd.f32 %v351, %v1670
    %1672 = vmatprep.mubr.bf16.mxu0 %v812
    %1673 = vmatmul.mubr.bf16.gmra.mxu0 %v811
    %v1674 = vpop.f32.mrf.mxu0
    %v1675 = vadd.f32 %v347, %v1674
    %v1676 = vpop.f32.mrf.mxu0
    %v1677 = vadd.f32 %v351, %v1676
    %v1678 = vpop.f32.mrf.mxu0
    %v1679 = vadd.f32 %v347, %v1678
    %v1680 = vpop.f32.mrf.mxu0
    %v1681 = vadd.f32 %v351, %v1680
    %1682 = vdwg.mxu0
    %1683 = vmatprep.subr.bf16.mxu0 %v1313
    %1684 = vmatpush1.bf16.msra.mxu0 %v1312
    %1685 = vmatprep.subr.bf16.mxu0 %v1311
    %1686 = vmatpush1.bf16.msra.mxu0 %v1310
    %1687 = vmatprep.subr.bf16.mxu0 %v1309
    %1688 = vmatpush1.bf16.msra.mxu0 %v1308
    %1689 = vmatprep.subr.bf16.mxu0 %v1307
    %1690 = vmatpush1.bf16.msra.mxu0 %v1306
    %1691 = vmatprep.subr.bf16.mxu0 %v1305
    %1692 = vmatpush1.bf16.msra.mxu0 %v1304
    %1693 = vmatprep.subr.bf16.mxu0 %v1303
    %1694 = vmatpush1.bf16.msra.mxu0 %v1302
    %1695 = vmatprep.subr.bf16.mxu0 %v1301
    %1696 = vmatpush1.bf16.msra.mxu0 %v1300
    %1697 = vmatprep.subr.bf16.mxu0 %v1299
    %1698 = vmatpush1.bf16.msra.mxu0 %v1298
    %1699 = vmatprep.subr.bf16.mxu0 %v1329
    %1700 = vmatpush2.bf16.msra.mxu0 %v1328
    %1701 = vmatprep.subr.bf16.mxu0 %v1327
    %1702 = vmatpush2.bf16.msra.mxu0 %v1326
    %1703 = vmatprep.subr.bf16.mxu0 %v1325
    %1704 = vmatpush2.bf16.msra.mxu0 %v1324
    %1705 = vmatprep.subr.bf16.mxu0 %v1323
    %1706 = vmatpush2.bf16.msra.mxu0 %v1322
    %1707 = vmatprep.subr.bf16.mxu0 %v1321
    %1708 = vmatpush2.bf16.msra.mxu0 %v1320
    %1709 = vmatprep.subr.bf16.mxu0 %v1319
    %1710 = vmatpush2.bf16.msra.mxu0 %v1318
    %1711 = vmatprep.subr.bf16.mxu0 %v1317
    %1712 = vmatpush2.bf16.msra.mxu0 %v1316
    %1713 = vmatprep.subr.bf16.mxu0 %v1315
    %1714 = vmatpush2.bf16.msra.mxu0 %v1314
    %1715 = vmatprep.mubr.bf16.mxu0 %v709
    %1716 = vmatmul.mubr.bf16.gmra.mxu0 %v708
    %v1717 = vpop.f32.mrf.mxu0
    %v1718 = vadd.f32 %v1525, %v1717
    %v1719 = vpop.f32.mrf.mxu0
    %v1720 = vadd.f32 %v1527, %v1719
    %v1721 = vpop.f32.mrf.mxu0
    %v1722 = vadd.f32 %v1529, %v1721
    %v1723 = vpop.f32.mrf.mxu0
    %v1724 = vadd.f32 %v1531, %v1723
    %1725 = vmatprep.mubr.bf16.mxu0 %v716
    %1726 = vmatmul.mubr.bf16.gmra.mxu0 %v715
    %v1727 = vpop.f32.mrf.mxu0
    %v1728 = vadd.f32 %v1535, %v1727
    %v1729 = vpop.f32.mrf.mxu0
    %v1730 = vadd.f32 %v1537, %v1729
    %v1731 = vpop.f32.mrf.mxu0
    %v1732 = vadd.f32 %v1539, %v1731
    %v1733 = vpop.f32.mrf.mxu0
    %v1734 = vadd.f32 %v1541, %v1733
    %1735 = vmatprep.mubr.bf16.mxu0 %v723
    %1736 = vmatmul.mubr.bf16.gmra.mxu0 %v722
    %v1737 = vpop.f32.mrf.mxu0
    %v1738 = vadd.f32 %v1545, %v1737
    %v1739 = vpop.f32.mrf.mxu0
    %v1740 = vadd.f32 %v1547, %v1739
    %v1741 = vpop.f32.mrf.mxu0
    %v1742 = vadd.f32 %v1549, %v1741
    %v1743 = vpop.f32.mrf.mxu0
    %v1744 = vadd.f32 %v1551, %v1743
    %1745 = vmatprep.mubr.bf16.mxu0 %v730
    %1746 = vmatmul.mubr.bf16.gmra.mxu0 %v729
    %v1747 = vpop.f32.mrf.mxu0
    %v1748 = vadd.f32 %v1555, %v1747
    %v1749 = vpop.f32.mrf.mxu0
    %v1750 = vadd.f32 %v1557, %v1749
    %v1751 = vpop.f32.mrf.mxu0
    %v1752 = vadd.f32 %v1559, %v1751
    %v1753 = vpop.f32.mrf.mxu0
    %v1754 = vadd.f32 %v1561, %v1753
    %1755 = vmatprep.mubr.bf16.mxu0 %v737
    %1756 = vmatmul.mubr.bf16.gmra.mxu0 %v736
    %v1757 = vpop.f32.mrf.mxu0
    %v1758 = vadd.f32 %v1565, %v1757
    %v1759 = vpop.f32.mrf.mxu0
    %v1760 = vadd.f32 %v1567, %v1759
    %v1761 = vpop.f32.mrf.mxu0
    %v1762 = vadd.f32 %v1569, %v1761
    %v1763 = vpop.f32.mrf.mxu0
    %v1764 = vadd.f32 %v1571, %v1763
    %1765 = vmatprep.mubr.bf16.mxu0 %v744
    %1766 = vmatmul.mubr.bf16.gmra.mxu0 %v743
    %v1767 = vpop.f32.mrf.mxu0
    %v1768 = vadd.f32 %v1575, %v1767
    %v1769 = vpop.f32.mrf.mxu0
    %v1770 = vadd.f32 %v1577, %v1769
    %v1771 = vpop.f32.mrf.mxu0
    %v1772 = vadd.f32 %v1579, %v1771
    %v1773 = vpop.f32.mrf.mxu0
    %v1774 = vadd.f32 %v1581, %v1773
    %1775 = vmatprep.mubr.bf16.mxu0 %v751
    %1776 = vmatmul.mubr.bf16.gmra.mxu0 %v750
    %v1777 = vpop.f32.mrf.mxu0
    %v1778 = vadd.f32 %v1585, %v1777
    %v1779 = vpop.f32.mrf.mxu0
    %v1780 = vadd.f32 %v1587, %v1779
    %v1781 = vpop.f32.mrf.mxu0
    %v1782 = vadd.f32 %v1589, %v1781
    %v1783 = vpop.f32.mrf.mxu0
    %v1784 = vadd.f32 %v1591, %v1783
    %1785 = vmatprep.mubr.bf16.mxu0 %v758
    %1786 = vmatmul.mubr.bf16.gmra.mxu0 %v757
    %v1787 = vpop.f32.mrf.mxu0
    %v1788 = vadd.f32 %v1595, %v1787
    %v1789 = vpop.f32.mrf.mxu0
    %v1790 = vadd.f32 %v1597, %v1789
    %v1791 = vpop.f32.mrf.mxu0
    %v1792 = vadd.f32 %v1599, %v1791
    %v1793 = vpop.f32.mrf.mxu0
    %v1794 = vadd.f32 %v1601, %v1793
    %1795 = vmatprep.mubr.bf16.mxu0 %v765
    %1796 = vmatmul.mubr.bf16.gmra.mxu0 %v764
    %v1797 = vpop.f32.mrf.mxu0
    %v1798 = vadd.f32 %v1605, %v1797
    %v1799 = vpop.f32.mrf.mxu0
    %v1800 = vadd.f32 %v1607, %v1799
    %v1801 = vpop.f32.mrf.mxu0
    %v1802 = vadd.f32 %v1609, %v1801
    %v1803 = vpop.f32.mrf.mxu0
    %v1804 = vadd.f32 %v1611, %v1803
    %1805 = vmatprep.mubr.bf16.mxu0 %v772
    %1806 = vmatmul.mubr.bf16.gmra.mxu0 %v771
    %v1807 = vpop.f32.mrf.mxu0
    %v1808 = vadd.f32 %v1615, %v1807
    %v1809 = vpop.f32.mrf.mxu0
    %v1810 = vadd.f32 %v1617, %v1809
    %v1811 = vpop.f32.mrf.mxu0
    %v1812 = vadd.f32 %v1619, %v1811
    %v1813 = vpop.f32.mrf.mxu0
    %v1814 = vadd.f32 %v1621, %v1813
    %1815 = vmatprep.mubr.bf16.mxu0 %v779
    %1816 = vmatmul.mubr.bf16.gmra.mxu0 %v778
    %v1817 = vpop.f32.mrf.mxu0
    %v1818 = vadd.f32 %v1625, %v1817
    %v1819 = vpop.f32.mrf.mxu0
    %v1820 = vadd.f32 %v1627, %v1819
    %v1821 = vpop.f32.mrf.mxu0
    %v1822 = vadd.f32 %v1629, %v1821
    %v1823 = vpop.f32.mrf.mxu0
    %v1824 = vadd.f32 %v1631, %v1823
    %1825 = vmatprep.mubr.bf16.mxu0 %v786
    %1826 = vmatmul.mubr.bf16.gmra.mxu0 %v785
    %v1827 = vpop.f32.mrf.mxu0
    %v1828 = vadd.f32 %v1635, %v1827
    %v1829 = vpop.f32.mrf.mxu0
    %v1830 = vadd.f32 %v1637, %v1829
    %v1831 = vpop.f32.mrf.mxu0
    %v1832 = vadd.f32 %v1639, %v1831
    %v1833 = vpop.f32.mrf.mxu0
    %v1834 = vadd.f32 %v1641, %v1833
    %1835 = vmatprep.mubr.bf16.mxu0 %v793
    %1836 = vmatmul.mubr.bf16.gmra.mxu0 %v792
    %v1837 = vpop.f32.mrf.mxu0
    %v1838 = vadd.f32 %v1645, %v1837
    %v1839 = vpop.f32.mrf.mxu0
    %v1840 = vadd.f32 %v1647, %v1839
    %v1841 = vpop.f32.mrf.mxu0
    %v1842 = vadd.f32 %v1649, %v1841
    %v1843 = vpop.f32.mrf.mxu0
    %v1844 = vadd.f32 %v1651, %v1843
    %1845 = vmatprep.mubr.bf16.mxu0 %v800
    %1846 = vmatmul.mubr.bf16.gmra.mxu0 %v799
    %v1847 = vpop.f32.mrf.mxu0
    %v1848 = vadd.f32 %v1655, %v1847
    %v1849 = vpop.f32.mrf.mxu0
    %v1850 = vadd.f32 %v1657, %v1849
    %v1851 = vpop.f32.mrf.mxu0
    %v1852 = vadd.f32 %v1659, %v1851
    %v1853 = vpop.f32.mrf.mxu0
    %v1854 = vadd.f32 %v1661, %v1853
    %1855 = vmatprep.mubr.bf16.mxu0 %v807
    %1856 = vmatmul.mubr.bf16.gmra.mxu0 %v806
    %v1857 = vpop.f32.mrf.mxu0
    %v1858 = vadd.f32 %v1665, %v1857
    %v1859 = vpop.f32.mrf.mxu0
    %v1860 = vadd.f32 %v1667, %v1859
    %v1861 = vpop.f32.mrf.mxu0
    %v1862 = vadd.f32 %v1669, %v1861
    %v1863 = vpop.f32.mrf.mxu0
    %v1864 = vadd.f32 %v1671, %v1863
    %1865 = vmatprep.mubr.bf16.mxu0 %v814
    %1866 = vmatmul.mubr.bf16.gmra.mxu0 %v813
    %v1867 = vpop.f32.mrf.mxu0
    %v1868 = vadd.f32 %v1675, %v1867
    %v1869 = vpop.f32.mrf.mxu0
    %v1870 = vadd.f32 %v1677, %v1869
    %v1871 = vpop.f32.mrf.mxu0
    %v1872 = vadd.f32 %v1679, %v1871
    %v1873 = vpop.f32.mrf.mxu0
    %v1874 = vadd.f32 %v1681, %v1873
    %1875 = vdwg.mxu0
    %1876 = vmatprep.subr.bf16.mxu0 %v1345
    %1877 = vmatpush1.bf16.msra.mxu0 %v1344
    %1878 = vmatprep.subr.bf16.mxu0 %v1343
    %1879 = vmatpush1.bf16.msra.mxu0 %v1342
    %1880 = vmatprep.subr.bf16.mxu0 %v1341
    %1881 = vmatpush1.bf16.msra.mxu0 %v1340
    %1882 = vmatprep.subr.bf16.mxu0 %v1339
    %1883 = vmatpush1.bf16.msra.mxu0 %v1338
    %1884 = vmatprep.subr.bf16.mxu0 %v1337
    %1885 = vmatpush1.bf16.msra.mxu0 %v1336
    %1886 = vmatprep.subr.bf16.mxu0 %v1335
    %1887 = vmatpush1.bf16.msra.mxu0 %v1334
    %1888 = vmatprep.subr.bf16.mxu0 %v1333
    %1889 = vmatpush1.bf16.msra.mxu0 %v1332
    %1890 = vmatprep.subr.bf16.mxu0 %v1331
    %1891 = vmatpush1.bf16.msra.mxu0 %v1330
    %1892 = vmatprep.subr.bf16.mxu0 %v1361
    %1893 = vmatpush2.bf16.msra.mxu0 %v1360
    %1894 = vmatprep.subr.bf16.mxu0 %v1359
    %1895 = vmatpush2.bf16.msra.mxu0 %v1358
    %1896 = vmatprep.subr.bf16.mxu0 %v1357
    %1897 = vmatpush2.bf16.msra.mxu0 %v1356
    %1898 = vmatprep.subr.bf16.mxu0 %v1355
    %1899 = vmatpush2.bf16.msra.mxu0 %v1354
    %1900 = vmatprep.subr.bf16.mxu0 %v1353
    %1901 = vmatpush2.bf16.msra.mxu0 %v1352
    %1902 = vmatprep.subr.bf16.mxu0 %v1351
    %1903 = vmatpush2.bf16.msra.mxu0 %v1350
    %1904 = vmatprep.subr.bf16.mxu0 %v1349
    %1905 = vmatpush2.bf16.msra.mxu0 %v1348
    %1906 = vmatprep.subr.bf16.mxu0 %v1347
    %1907 = vmatpush2.bf16.msra.mxu0 %v1346
    %1908 = vmatprep.mubr.bf16.mxu0 %v711
    %1909 = vmatmul.mubr.bf16.gmra.mxu0 %v710
    %v1910 = vpop.f32.mrf.mxu0
    %v1911 = vadd.f32 %v1718, %v1910
    %v1912 = vpop.f32.mrf.mxu0
    %v1913 = vadd.f32 %v1720, %v1912
    %v1914 = vpop.f32.mrf.mxu0
    %v1915 = vadd.f32 %v1722, %v1914
    %v1916 = vpop.f32.mrf.mxu0
    %v1917 = vadd.f32 %v1724, %v1916
    %1918 = vmatprep.mubr.bf16.mxu0 %v718
    %1919 = vmatmul.mubr.bf16.gmra.mxu0 %v717
    %v1920 = vpop.f32.mrf.mxu0
    %v1921 = vadd.f32 %v1728, %v1920
    %v1922 = vpop.f32.mrf.mxu0
    %v1923 = vadd.f32 %v1730, %v1922
    %v1924 = vpop.f32.mrf.mxu0
    %v1925 = vadd.f32 %v1732, %v1924
    %v1926 = vpop.f32.mrf.mxu0
    %v1927 = vadd.f32 %v1734, %v1926
    %1928 = vmatprep.mubr.bf16.mxu0 %v725
    %1929 = vmatmul.mubr.bf16.gmra.mxu0 %v724
    %v1930 = vpop.f32.mrf.mxu0
    %v1931 = vadd.f32 %v1738, %v1930
    %v1932 = vpop.f32.mrf.mxu0
    %v1933 = vadd.f32 %v1740, %v1932
    %v1934 = vpop.f32.mrf.mxu0
    %v1935 = vadd.f32 %v1742, %v1934
    %v1936 = vpop.f32.mrf.mxu0
    %v1937 = vadd.f32 %v1744, %v1936
    %1938 = vmatprep.mubr.bf16.mxu0 %v732
    %1939 = vmatmul.mubr.bf16.gmra.mxu0 %v731
    %v1940 = vpop.f32.mrf.mxu0
    %v1941 = vadd.f32 %v1748, %v1940
    %v1942 = vpop.f32.mrf.mxu0
    %v1943 = vadd.f32 %v1750, %v1942
    %v1944 = vpop.f32.mrf.mxu0
    %v1945 = vadd.f32 %v1752, %v1944
    %v1946 = vpop.f32.mrf.mxu0
    %v1947 = vadd.f32 %v1754, %v1946
    %1948 = vmatprep.mubr.bf16.mxu0 %v739
    %1949 = vmatmul.mubr.bf16.gmra.mxu0 %v738
    %v1950 = vpop.f32.mrf.mxu0
    %v1951 = vadd.f32 %v1758, %v1950
    %v1952 = vpop.f32.mrf.mxu0
    %v1953 = vadd.f32 %v1760, %v1952
    %v1954 = vpop.f32.mrf.mxu0
    %v1955 = vadd.f32 %v1762, %v1954
    %v1956 = vpop.f32.mrf.mxu0
    %v1957 = vadd.f32 %v1764, %v1956
    %1958 = vmatprep.mubr.bf16.mxu0 %v746
    %1959 = vmatmul.mubr.bf16.gmra.mxu0 %v745
    %v1960 = vpop.f32.mrf.mxu0
    %v1961 = vadd.f32 %v1768, %v1960
    %v1962 = vpop.f32.mrf.mxu0
    %v1963 = vadd.f32 %v1770, %v1962
    %v1964 = vpop.f32.mrf.mxu0
    %v1965 = vadd.f32 %v1772, %v1964
    %v1966 = vpop.f32.mrf.mxu0
    %v1967 = vadd.f32 %v1774, %v1966
    %1968 = vmatprep.mubr.bf16.mxu0 %v753
    %1969 = vmatmul.mubr.bf16.gmra.mxu0 %v752
    %v1970 = vpop.f32.mrf.mxu0
    %v1971 = vadd.f32 %v1778, %v1970
    %v1972 = vpop.f32.mrf.mxu0
    %v1973 = vadd.f32 %v1780, %v1972
    %v1974 = vpop.f32.mrf.mxu0
    %v1975 = vadd.f32 %v1782, %v1974
    %v1976 = vpop.f32.mrf.mxu0
    %v1977 = vadd.f32 %v1784, %v1976
    %1978 = vmatprep.mubr.bf16.mxu0 %v760
    %1979 = vmatmul.mubr.bf16.gmra.mxu0 %v759
    %v1980 = vpop.f32.mrf.mxu0
    %v1981 = vadd.f32 %v1788, %v1980
    %v1982 = vpop.f32.mrf.mxu0
    %v1983 = vadd.f32 %v1790, %v1982
    %v1984 = vpop.f32.mrf.mxu0
    %v1985 = vadd.f32 %v1792, %v1984
    %v1986 = vpop.f32.mrf.mxu0
    %v1987 = vadd.f32 %v1794, %v1986
    %1988 = vmatprep.mubr.bf16.mxu0 %v767
    %1989 = vmatmul.mubr.bf16.gmra.mxu0 %v766
    %v1990 = vpop.f32.mrf.mxu0
    %v1991 = vadd.f32 %v1798, %v1990
    %v1992 = vpop.f32.mrf.mxu0
    %v1993 = vadd.f32 %v1800, %v1992
    %v1994 = vpop.f32.mrf.mxu0
    %v1995 = vadd.f32 %v1802, %v1994
    %v1996 = vpop.f32.mrf.mxu0
    %v1997 = vadd.f32 %v1804, %v1996
    %1998 = vmatprep.mubr.bf16.mxu0 %v774
    %1999 = vmatmul.mubr.bf16.gmra.mxu0 %v773
    %v2000 = vpop.f32.mrf.mxu0
    %v2001 = vadd.f32 %v1808, %v2000
    %v2002 = vpop.f32.mrf.mxu0
    %v2003 = vadd.f32 %v1810, %v2002
    %v2004 = vpop.f32.mrf.mxu0
    %v2005 = vadd.f32 %v1812, %v2004
    %v2006 = vpop.f32.mrf.mxu0
    %v2007 = vadd.f32 %v1814, %v2006
    %2008 = vmatprep.mubr.bf16.mxu0 %v781
    %2009 = vmatmul.mubr.bf16.gmra.mxu0 %v780
    %v2010 = vpop.f32.mrf.mxu0
    %v2011 = vadd.f32 %v1818, %v2010
    %v2012 = vpop.f32.mrf.mxu0
    %v2013 = vadd.f32 %v1820, %v2012
    %v2014 = vpop.f32.mrf.mxu0
    %v2015 = vadd.f32 %v1822, %v2014
    %v2016 = vpop.f32.mrf.mxu0
    %v2017 = vadd.f32 %v1824, %v2016
    %2018 = vmatprep.mubr.bf16.mxu0 %v788
    %2019 = vmatmul.mubr.bf16.gmra.mxu0 %v787
    %v2020 = vpop.f32.mrf.mxu0
    %v2021 = vadd.f32 %v1828, %v2020
    %v2022 = vpop.f32.mrf.mxu0
    %v2023 = vadd.f32 %v1830, %v2022
    %v2024 = vpop.f32.mrf.mxu0
    %v2025 = vadd.f32 %v1832, %v2024
    %v2026 = vpop.f32.mrf.mxu0
    %v2027 = vadd.f32 %v1834, %v2026
    %2028 = vmatprep.mubr.bf16.mxu0 %v795
    %2029 = vmatmul.mubr.bf16.gmra.mxu0 %v794
    %v2030 = vpop.f32.mrf.mxu0
    %v2031 = vadd.f32 %v1838, %v2030
    %v2032 = vpop.f32.mrf.mxu0
    %v2033 = vadd.f32 %v1840, %v2032
    %v2034 = vpop.f32.mrf.mxu0
    %v2035 = vadd.f32 %v1842, %v2034
    %v2036 = vpop.f32.mrf.mxu0
    %v2037 = vadd.f32 %v1844, %v2036
    %2038 = vmatprep.mubr.bf16.mxu0 %v802
    %2039 = vmatmul.mubr.bf16.gmra.mxu0 %v801
    %v2040 = vpop.f32.mrf.mxu0
    %v2041 = vadd.f32 %v1848, %v2040
    %v2042 = vpop.f32.mrf.mxu0
    %v2043 = vadd.f32 %v1850, %v2042
    %v2044 = vpop.f32.mrf.mxu0
    %v2045 = vadd.f32 %v1852, %v2044
    %v2046 = vpop.f32.mrf.mxu0
    %v2047 = vadd.f32 %v1854, %v2046
    %2048 = vmatprep.mubr.bf16.mxu0 %v809
    %2049 = vmatmul.mubr.bf16.gmra.mxu0 %v808
    %v2050 = vpop.f32.mrf.mxu0
    %v2051 = vadd.f32 %v1858, %v2050
    %v2052 = vpop.f32.mrf.mxu0
    %v2053 = vadd.f32 %v1860, %v2052
    %v2054 = vpop.f32.mrf.mxu0
    %v2055 = vadd.f32 %v1862, %v2054
    %v2056 = vpop.f32.mrf.mxu0
    %v2057 = vadd.f32 %v1864, %v2056
    %2058 = vmatprep.mubr.bf16.mxu0 %v816
    %2059 = vmatmul.mubr.bf16.gmra.mxu0 %v815
    %v2060 = vpop.f32.mrf.mxu0
    %v2061 = vadd.f32 %v1868, %v2060
    %v2062 = vpop.f32.mrf.mxu0
    %v2063 = vadd.f32 %v1870, %v2062
    %v2064 = vpop.f32.mrf.mxu0
    %v2065 = vadd.f32 %v1872, %v2064
    %v2066 = vpop.f32.mrf.mxu0
    %v2067 = vadd.f32 %v1874, %v2066
    %2068 = vdwg.mxu0
    %2069 = vmatprep.subr.bf16.mxu0 %v1377
    %2070 = vmatpush1.bf16.msra.mxu0 %v1376
    %2071 = vmatprep.subr.bf16.mxu0 %v1375
    %2072 = vmatpush1.bf16.msra.mxu0 %v1374
    %2073 = vmatprep.subr.bf16.mxu0 %v1373
    %2074 = vmatpush1.bf16.msra.mxu0 %v1372
    %2075 = vmatprep.subr.bf16.mxu0 %v1371
    %2076 = vmatpush1.bf16.msra.mxu0 %v1370
    %2077 = vmatprep.subr.bf16.mxu0 %v1369
    %2078 = vmatpush1.bf16.msra.mxu0 %v1368
    %2079 = vmatprep.subr.bf16.mxu0 %v1367
    %2080 = vmatpush1.bf16.msra.mxu0 %v1366
    %2081 = vmatprep.subr.bf16.mxu0 %v1365
    %2082 = vmatpush1.bf16.msra.mxu0 %v1364
    %2083 = vmatprep.subr.bf16.mxu0 %v1363
    %2084 = vmatpush1.bf16.msra.mxu0 %v1362
    %2085 = vmatprep.subr.bf16.mxu0 0
    %2086 = vmatpush2.bf16.msra.mxu0 0
    %2087 = vmatprep.subr.bf16.mxu0 0
    %2088 = vmatpush2.bf16.msra.mxu0 0
    %2089 = vmatprep.subr.bf16.mxu0 0
    %2090 = vmatpush2.bf16.msra.mxu0 0
    %2091 = vmatprep.subr.bf16.mxu0 0
    %2092 = vmatpush2.bf16.msra.mxu0 0
    %2093 = vmatprep.subr.bf16.mxu0 0
    %2094 = vmatpush2.bf16.msra.mxu0 0
    %2095 = vmatprep.subr.bf16.mxu0 0
    %2096 = vmatpush2.bf16.msra.mxu0 0
    %2097 = vmatprep.subr.bf16.mxu0 0
    %2098 = vmatpush2.bf16.msra.mxu0 0
    %2099 = vmatprep.subr.bf16.mxu0 0
    %2100 = vmatpush2.bf16.msra.mxu0 0
    %2101 = vmatprep.mubr.bf16.mxu0 0
    %2102 = vmatmul.mubr.bf16.gmra.mxu0 %v712
    %v2103 = vpop.f32.mrf.mxu0
    %v2104 = vadd.f32 %v1911, %v2103
    %v2105 = vpop.f32.mrf.mxu0
    %v2106 = vadd.f32 %v1913, %v2105
    %v2107 = vpop.f32.mrf.mxu0
    %v2108 = vadd.f32 %v1915, %v2107
    %v2109 = vpop.f32.mrf.mxu0
    %v2110 = vadd.f32 %v1917, %v2109
    %2111 = vmatprep.mubr.bf16.mxu0 0
    %2112 = vmatmul.mubr.bf16.gmra.mxu0 %v719
    %v2113 = vpop.f32.mrf.mxu0
    %v2114 = vadd.f32 %v1921, %v2113
    %v2115 = vpop.f32.mrf.mxu0
    %v2116 = vadd.f32 %v1923, %v2115
    %v2117 = vpop.f32.mrf.mxu0
    %v2118 = vadd.f32 %v1925, %v2117
    %v2119 = vpop.f32.mrf.mxu0
    %v2120 = vadd.f32 %v1927, %v2119
    %2121 = vmatprep.mubr.bf16.mxu0 0
    %2122 = vmatmul.mubr.bf16.gmra.mxu0 %v726
    %v2123 = vpop.f32.mrf.mxu0
    %v2124 = vadd.f32 %v1931, %v2123
    %v2125 = vpop.f32.mrf.mxu0
    %v2126 = vadd.f32 %v1933, %v2125
    %v2127 = vpop.f32.mrf.mxu0
    %v2128 = vadd.f32 %v1935, %v2127
    %v2129 = vpop.f32.mrf.mxu0
    %v2130 = vadd.f32 %v1937, %v2129
    %2131 = vmatprep.mubr.bf16.mxu0 0
    %2132 = vmatmul.mubr.bf16.gmra.mxu0 %v733
    %v2133 = vpop.f32.mrf.mxu0
    %v2134 = vadd.f32 %v1941, %v2133
    %v2135 = vpop.f32.mrf.mxu0
    %v2136 = vadd.f32 %v1943, %v2135
    %v2137 = vpop.f32.mrf.mxu0
    %v2138 = vadd.f32 %v1945, %v2137
    %v2139 = vpop.f32.mrf.mxu0
    %v2140 = vadd.f32 %v1947, %v2139
    %2141 = vmatprep.mubr.bf16.mxu0 0
    %2142 = vmatmul.mubr.bf16.gmra.mxu0 %v740
    %v2143 = vpop.f32.mrf.mxu0
    %v2144 = vadd.f32 %v1951, %v2143
    %v2145 = vpop.f32.mrf.mxu0
    %v2146 = vadd.f32 %v1953, %v2145
    %v2147 = vpop.f32.mrf.mxu0
    %v2148 = vadd.f32 %v1955, %v2147
    %v2149 = vpop.f32.mrf.mxu0
    %v2150 = vadd.f32 %v1957, %v2149
    %2151 = vmatprep.mubr.bf16.mxu0 0
    %2152 = vmatmul.mubr.bf16.gmra.mxu0 %v747
    %v2153 = vpop.f32.mrf.mxu0
    %v2154 = vadd.f32 %v1961, %v2153
    %v2155 = vpop.f32.mrf.mxu0
    %v2156 = vadd.f32 %v1963, %v2155
    %v2157 = vpop.f32.mrf.mxu0
    %v2158 = vadd.f32 %v1965, %v2157
    %v2159 = vpop.f32.mrf.mxu0
    %v2160 = vadd.f32 %v1967, %v2159
    %2161 = vmatprep.mubr.bf16.mxu0 0
    %2162 = vmatmul.mubr.bf16.gmra.mxu0 %v754
    %v2163 = vpop.f32.mrf.mxu0
    %v2164 = vadd.f32 %v1971, %v2163
    %v2165 = vpop.f32.mrf.mxu0
    %v2166 = vadd.f32 %v1973, %v2165
    %v2167 = vpop.f32.mrf.mxu0
    %v2168 = vadd.f32 %v1975, %v2167
    %v2169 = vpop.f32.mrf.mxu0
    %v2170 = vadd.f32 %v1977, %v2169
    %2171 = vmatprep.mubr.bf16.mxu0 0
    %2172 = vmatmul.mubr.bf16.gmra.mxu0 %v761
    %v2173 = vpop.f32.mrf.mxu0
    %v2174 = vadd.f32 %v1981, %v2173
    %v2175 = vpop.f32.mrf.mxu0
    %v2176 = vadd.f32 %v1983, %v2175
    %v2177 = vpop.f32.mrf.mxu0
    %v2178 = vadd.f32 %v1985, %v2177
    %v2179 = vpop.f32.mrf.mxu0
    %v2180 = vadd.f32 %v1987, %v2179
    %2181 = vmatprep.mubr.bf16.mxu0 0
    %2182 = vmatmul.mubr.bf16.gmra.mxu0 %v768
    %v2183 = vpop.f32.mrf.mxu0
    %v2184 = vadd.f32 %v1991, %v2183
    %v2185 = vpop.f32.mrf.mxu0
    %v2186 = vadd.f32 %v1993, %v2185
    %v2187 = vpop.f32.mrf.mxu0
    %v2188 = vadd.f32 %v1995, %v2187
    %v2189 = vpop.f32.mrf.mxu0
    %v2190 = vadd.f32 %v1997, %v2189
    %2191 = vmatprep.mubr.bf16.mxu0 0
    %2192 = vmatmul.mubr.bf16.gmra.mxu0 %v775
    %v2193 = vpop.f32.mrf.mxu0
    %v2194 = vadd.f32 %v2001, %v2193
    %v2195 = vpop.f32.mrf.mxu0
    %v2196 = vadd.f32 %v2003, %v2195
    %v2197 = vpop.f32.mrf.mxu0
    %v2198 = vadd.f32 %v2005, %v2197
    %v2199 = vpop.f32.mrf.mxu0
    %v2200 = vadd.f32 %v2007, %v2199
    %2201 = vmatprep.mubr.bf16.mxu0 0
    %2202 = vmatmul.mubr.bf16.gmra.mxu0 %v782
    %v2203 = vpop.f32.mrf.mxu0
    %v2204 = vadd.f32 %v2011, %v2203
    %v2205 = vpop.f32.mrf.mxu0
    %v2206 = vadd.f32 %v2013, %v2205
    %v2207 = vpop.f32.mrf.mxu0
    %v2208 = vadd.f32 %v2015, %v2207
    %v2209 = vpop.f32.mrf.mxu0
    %v2210 = vadd.f32 %v2017, %v2209
    %2211 = vmatprep.mubr.bf16.mxu0 0
    %2212 = vmatmul.mubr.bf16.gmra.mxu0 %v789
    %v2213 = vpop.f32.mrf.mxu0
    %v2214 = vadd.f32 %v2021, %v2213
    %v2215 = vpop.f32.mrf.mxu0
    %v2216 = vadd.f32 %v2023, %v2215
    %v2217 = vpop.f32.mrf.mxu0
    %v2218 = vadd.f32 %v2025, %v2217
    %v2219 = vpop.f32.mrf.mxu0
    %v2220 = vadd.f32 %v2027, %v2219
    %2221 = vmatprep.mubr.bf16.mxu0 0
    %2222 = vmatmul.mubr.bf16.gmra.mxu0 %v796
    %v2223 = vpop.f32.mrf.mxu0
    %v2224 = vadd.f32 %v2031, %v2223
    %v2225 = vpop.f32.mrf.mxu0
    %v2226 = vadd.f32 %v2033, %v2225
    %v2227 = vpop.f32.mrf.mxu0
    %v2228 = vadd.f32 %v2035, %v2227
    %v2229 = vpop.f32.mrf.mxu0
    %v2230 = vadd.f32 %v2037, %v2229
    %2231 = vmatprep.mubr.bf16.mxu0 0
    %2232 = vmatmul.mubr.bf16.gmra.mxu0 %v803
    %v2233 = vpop.f32.mrf.mxu0
    %v2234 = vadd.f32 %v2041, %v2233
    %v2235 = vpop.f32.mrf.mxu0
    %v2236 = vadd.f32 %v2043, %v2235
    %v2237 = vpop.f32.mrf.mxu0
    %v2238 = vadd.f32 %v2045, %v2237
    %v2239 = vpop.f32.mrf.mxu0
    %v2240 = vadd.f32 %v2047, %v2239
    %2241 = vmatprep.mubr.bf16.mxu0 0
    %2242 = vmatmul.mubr.bf16.gmra.mxu0 %v810
    %v2243 = vpop.f32.mrf.mxu0
    %v2244 = vadd.f32 %v2051, %v2243
    %v2245 = vpop.f32.mrf.mxu0
    %v2246 = vadd.f32 %v2053, %v2245
    %v2247 = vpop.f32.mrf.mxu0
    %v2248 = vadd.f32 %v2055, %v2247
    %v2249 = vpop.f32.mrf.mxu0
    %v2250 = vadd.f32 %v2057, %v2249
    %2251 = vmatprep.mubr.bf16.mxu0 0
    %2252 = vmatmul.mubr.bf16.gmra.mxu0 %v817
    %v2253 = vpop.f32.mrf.mxu0
    %v2254 = vadd.f32 %v2061, %v2253
    %v2255 = vpop.f32.mrf.mxu0
    %v2256 = vadd.f32 %v2063, %v2255
    %v2257 = vpop.f32.mrf.mxu0
    %v2258 = vadd.f32 %v2065, %v2257
    %v2259 = vpop.f32.mrf.mxu0
    %v2260 = vadd.f32 %v2067, %v2259
    %2261 = vdwg.mxu0
    %v2262 = vmax.f32 %v2104, 0.0
    %v2263 = vmax.f32 %v2106, 0.0
    %v2264 = vmax.f32 %v2108, 0.0
    %v2265 = vmax.f32 %v2110, 0.0
    %v2266 = vmax.f32 %v2114, 0.0
    %v2267 = vmax.f32 %v2116, 0.0
    %v2268 = vmax.f32 %v2118, 0.0
    %v2269 = vmax.f32 %v2120, 0.0
    %v2270 = vmax.f32 %v2124, 0.0
    %v2271 = vmax.f32 %v2126, 0.0
    %v2272 = vmax.f32 %v2128, 0.0
    %v2273 = vmax.f32 %v2130, 0.0
    %v2274 = vmax.f32 %v2134, 0.0
    %v2275 = vmax.f32 %v2136, 0.0
    %v2276 = vmax.f32 %v2138, 0.0
    %v2277 = vmax.f32 %v2140, 0.0
    %v2278 = vmax.f32 %v2144, 0.0
    %v2279 = vmax.f32 %v2146, 0.0
    %v2280 = vmax.f32 %v2148, 0.0
    %v2281 = vmax.f32 %v2150, 0.0
    %v2282 = vmax.f32 %v2154, 0.0
    %v2283 = vmax.f32 %v2156, 0.0
    %v2284 = vmax.f32 %v2158, 0.0
    %v2285 = vmax.f32 %v2160, 0.0
    %v2286 = vmax.f32 %v2164, 0.0
    %v2287 = vmax.f32 %v2166, 0.0
    %v2288 = vmax.f32 %v2168, 0.0
    %v2289 = vmax.f32 %v2170, 0.0
    %v2290 = vmax.f32 %v2174, 0.0
    %v2291 = vmax.f32 %v2176, 0.0
    %v2292 = vmax.f32 %v2178, 0.0
    %v2293 = vmax.f32 %v2180, 0.0
    %v2294 = vmax.f32 %v2184, 0.0
    %v2295 = vmax.f32 %v2186, 0.0
    %v2296 = vmax.f32 %v2188, 0.0
    %v2297 = vmax.f32 %v2190, 0.0
    %v2298 = vmax.f32 %v2194, 0.0
    %v2299 = vmax.f32 %v2196, 0.0
    %v2300 = vmax.f32 %v2198, 0.0
    %v2301 = vmax.f32 %v2200, 0.0
    %v2302 = vmax.f32 %v2204, 0.0
    %v2303 = vmax.f32 %v2206, 0.0
    %v2304 = vmax.f32 %v2208, 0.0
    %v2305 = vmax.f32 %v2210, 0.0
    %v2306 = vmax.f32 %v2214, 0.0
    %v2307 = vmax.f32 %v2216, 0.0
    %v2308 = vmax.f32 %v2218, 0.0
    %v2309 = vmax.f32 %v2220, 0.0
    %v2310 = vmax.f32 %v2224, 0.0
    %v2311 = vmax.f32 %v2226, 0.0
    %v2312 = vmax.f32 %v2228, 0.0
    %v2313 = vmax.f32 %v2230, 0.0
    %v2314 = vmax.f32 %v2234, 0.0
    %v2315 = vmax.f32 %v2236, 0.0
    %v2316 = vmax.f32 %v2238, 0.0
    %v2317 = vmax.f32 %v2240, 0.0
    %v2318 = vmax.f32 %v2244, 0.0
    %v2319 = vmax.f32 %v2246, 0.0
    %v2320 = vmax.f32 %v2248, 0.0
    %v2321 = vmax.f32 %v2250, 0.0
    %v2322 = vmax.f32 %v2254, 0.0
    %v2323 = vmax.f32 %v2256, 0.0
    %v2324 = vmax.f32 %v2258, 0.0
    %v2325 = vmax.f32 %v2260, 0.0
    %v2326 = vpack.c.bf16 %v2264, %v2262
    %v2327 = vpack.c.bf16 %v2265, %v2263
    %v2328 = vpack.c.bf16 %v2268, %v2266
    %v2329 = vpack.c.bf16 %v2269, %v2267
    %v2330 = vpack.c.bf16 %v2272, %v2270
    %v2331 = vpack.c.bf16 %v2273, %v2271
    %v2332 = vpack.c.bf16 %v2276, %v2274
    %v2333 = vpack.c.bf16 %v2277, %v2275
    %v2334 = vpack.c.bf16 %v2280, %v2278
    %v2335 = vpack.c.bf16 %v2281, %v2279
    %v2336 = vpack.c.bf16 %v2284, %v2282
    %v2337 = vpack.c.bf16 %v2285, %v2283
    %v2338 = vpack.c.bf16 %v2288, %v2286
    %v2339 = vpack.c.bf16 %v2289, %v2287
    %v2340 = vpack.c.bf16 %v2292, %v2290
    %v2341 = vpack.c.bf16 %v2293, %v2291
    %v2342 = vpack.c.bf16 %v2296, %v2294
    %v2343 = vpack.c.bf16 %v2297, %v2295
    %v2344 = vpack.c.bf16 %v2300, %v2298
    %v2345 = vpack.c.bf16 %v2301, %v2299
    %v2346 = vpack.c.bf16 %v2304, %v2302
    %v2347 = vpack.c.bf16 %v2305, %v2303
    %v2348 = vpack.c.bf16 %v2308, %v2306
    %v2349 = vpack.c.bf16 %v2309, %v2307
    %v2350 = vpack.c.bf16 %v2312, %v2310
    %v2351 = vpack.c.bf16 %v2313, %v2311
    %v2352 = vpack.c.bf16 %v2316, %v2314
    %v2353 = vpack.c.bf16 %v2317, %v2315
    %v2354 = vpack.c.bf16 %v2320, %v2318
    %v2355 = vpack.c.bf16 %v2321, %v2319
    %v2356 = vpack.c.bf16 %v2324, %v2322
    %v2357 = vpack.c.bf16 %v2325, %v2323
    %v2358 = vld [vmem:[#allocation7] sm:$0xf]
    %v2359 = vld [vmem:[#allocation7 + $0x4] sm:$0xf]
    %v2360 = vld [vmem:[#allocation7 + $0x8] sm:$0xf]
    %v2361 = vld [vmem:[#allocation7 + $0xc] sm:$0xf]
    %v2362 = vld [vmem:[#allocation7 + $0x10] sm:$0xf]
    %v2363 = vld [vmem:[#allocation7 + $0x14] sm:$0xf]
    %v2364 = vld [vmem:[#allocation7 + $0x18] sm:$0xf]
    %v2365 = vld [vmem:[#allocation7 + $0x1c] sm:$0xf]
    %v2366 = vld [vmem:[#allocation7 + $0x20] sm:$0xf]
    %v2367 = vld [vmem:[#allocation7 + $0x24] sm:$0xf]
    %v2368 = vld [vmem:[#allocation7 + $0x28] sm:$0xf]
    %v2369 = vld [vmem:[#allocation7 + $0x2c] sm:$0xf]
    %v2370 = vld [vmem:[#allocation7 + $0x30] sm:$0xf]
    %v2371 = vld [vmem:[#allocation7 + $0x34] sm:$0xf]
    %v2372 = vld [vmem:[#allocation7 + $0x38] sm:$0xf]
    %v2373 = vld [vmem:[#allocation7 + $0x3c] sm:$0xf]
    %v2374 = vld [vmem:[#allocation7 + $0x40] sm:$0xf]
    %v2375 = vld [vmem:[#allocation7 + $0x44] sm:$0xf]
    %v2376 = vld [vmem:[#allocation7 + $0x48] sm:$0xf]
    %v2377 = vld [vmem:[#allocation7 + $0x4c] sm:$0xf]
    %v2378 = vld [vmem:[#allocation7 + $0x50] sm:$0xf]
    %v2379 = vld [vmem:[#allocation7 + $0x54] sm:$0xf]
    %v2380 = vld [vmem:[#allocation7 + $0x58] sm:$0xf]
    %v2381 = vld [vmem:[#allocation7 + $0x5c] sm:$0xf]
    %v2382 = vld [vmem:[#allocation7 + $0x60] sm:$0xf]
    %v2383 = vld [vmem:[#allocation7 + $0x64] sm:$0xf]
    %v2384 = vld [vmem:[#allocation7 + $0x68] sm:$0xf]
    %v2385 = vld [vmem:[#allocation7 + $0x6c] sm:$0xf]
    %v2386 = vld [vmem:[#allocation7 + $0x70] sm:$0xf]
    %v2387 = vld [vmem:[#allocation7 + $0x74] sm:$0xf]
    %v2388 = vld [vmem:[#allocation7 + $0x78] sm:$0xf]
    %v2389 = vld [vmem:[#allocation7 + $0x7c] sm:$0xf]
    %v2390 = vld [vmem:[%s4] sm:$0x1]
    %v2392 = vlaneseq
    %v2393 = vshrl.u32 %v2392, 7
    %v2394 = vsub.s32 0, %v2393
    %v2395 = vrot.slane %v2390, %v2394
    %v2429 = vunpack.c.l.b16 %v2358
    %v2430 = vunpack.c.l.b16 %v2359
    %v2431 = vunpack.c.l.b16 %v2360
    %v2432 = vunpack.c.l.b16 %v2361
    %v2433 = vunpack.c.l.b16 %v2362
    %v2434 = vunpack.c.l.b16 %v2363
    %v2435 = vunpack.c.l.b16 %v2364
    %v2436 = vunpack.c.l.b16 %v2365
    %v2437 = vunpack.c.l.b16 %v2366
    %v2438 = vunpack.c.l.b16 %v2367
    %v2439 = vunpack.c.l.b16 %v2368
    %v2440 = vunpack.c.l.b16 %v2369
    %v2441 = vunpack.c.l.b16 %v2370
    %v2442 = vunpack.c.l.b16 %v2371
    %v2443 = vunpack.c.l.b16 %v2372
    %v2444 = vunpack.c.l.b16 %v2373
    %v2445 = vunpack.c.l.b16 %v2374
    %v2446 = vunpack.c.l.b16 %v2375
    %v2447 = vunpack.c.l.b16 %v2376
    %v2448 = vunpack.c.l.b16 %v2377
    %v2449 = vunpack.c.l.b16 %v2378
    %v2450 = vunpack.c.l.b16 %v2379
    %v2451 = vunpack.c.l.b16 %v2380
    %v2452 = vunpack.c.l.b16 %v2381
    %v2453 = vunpack.c.l.b16 %v2382
    %v2454 = vunpack.c.l.b16 %v2383
    %v2455 = vunpack.c.l.b16 %v2384
    %v2456 = vunpack.c.l.b16 %v2385
    %v2457 = vunpack.c.l.b16 %v2386
    %v2458 = vunpack.c.l.b16 %v2387
    %v2459 = vunpack.c.l.b16 %v2388
    %v2460 = vunpack.c.l.b16 %v2389
    %v2461 = vpack.c.b16 %v2430, %v2429
    %v2462 = vpack.c.b16 %v2432, %v2431
    %v2463 = vpack.c.b16 %v2434, %v2433
    %v2464 = vpack.c.b16 %v2436, %v2435
    %v2465 = vpack.c.b16 %v2438, %v2437
    %v2466 = vpack.c.b16 %v2440, %v2439
    %v2467 = vpack.c.b16 %v2442, %v2441
    %v2468 = vpack.c.b16 %v2444, %v2443
    %v2469 = vpack.c.b16 %v2446, %v2445
    %v2470 = vpack.c.b16 %v2448, %v2447
    %v2471 = vpack.c.b16 %v2450, %v2449
    %v2472 = vpack.c.b16 %v2452, %v2451
    %v2473 = vpack.c.b16 %v2454, %v2453
    %v2474 = vpack.c.b16 %v2456, %v2455
    %v2475 = vpack.c.b16 %v2458, %v2457
    %v2476 = vpack.c.b16 %v2460, %v2459
    %2493 = vmatprep.subr.bf16.mxu0 0
    %2494 = vmatpush1.bf16.msra.mxu0 %v2468
    %2495 = vmatprep.subr.bf16.mxu0 0
    %2496 = vmatpush1.bf16.msra.mxu0 %v2467
    %2497 = vmatprep.subr.bf16.mxu0 0
    %2498 = vmatpush1.bf16.msra.mxu0 %v2466
    %2499 = vmatprep.subr.bf16.mxu0 0
    %2500 = vmatpush1.bf16.msra.mxu0 %v2465
    %2501 = vmatprep.subr.bf16.mxu0 0
    %2502 = vmatpush1.bf16.msra.mxu0 %v2464
    %2503 = vmatprep.subr.bf16.mxu0 0
    %2504 = vmatpush1.bf16.msra.mxu0 %v2463
    %2505 = vmatprep.subr.bf16.mxu0 0
    %2506 = vmatpush1.bf16.msra.mxu0 %v2462
    %2507 = vmatprep.subr.bf16.mxu0 0
    %2508 = vmatpush1.bf16.msra.mxu0 %v2461
    %2509 = vmatprep.subr.bf16.mxu0 0
    %2510 = vmatpush2.bf16.msra.mxu0 %v2476
    %2511 = vmatprep.subr.bf16.mxu0 0
    %2512 = vmatpush2.bf16.msra.mxu0 %v2475
    %2513 = vmatprep.subr.bf16.mxu0 0
    %2514 = vmatpush2.bf16.msra.mxu0 %v2474
    %2515 = vmatprep.subr.bf16.mxu0 0
    %2516 = vmatpush2.bf16.msra.mxu0 %v2473
    %2517 = vmatprep.subr.bf16.mxu0 0
    %2518 = vmatpush2.bf16.msra.mxu0 %v2472
    %2519 = vmatprep.subr.bf16.mxu0 0
    %2520 = vmatpush2.bf16.msra.mxu0 %v2471
    %2521 = vmatprep.subr.bf16.mxu0 0
    %2522 = vmatpush2.bf16.msra.mxu0 %v2470
    %2523 = vmatprep.subr.bf16.mxu0 0
    %2524 = vmatpush2.bf16.msra.mxu0 %v2469
    %2525 = vmatprep.mubr.bf16.mxu0 %v2327
    %2526 = vmatmul.mubr.bf16.gmra.mxu0 %v2326
    %v2527 = vpop.f32.mrf.mxu0
    %v2528 = vadd.f32 %v2395, %v2527
    %v2529 = vpop.f32.mrf.mxu0
    %v2530 = vpop.f32.mrf.mxu0
    %v2531 = vadd.f32 %v2395, %v2530
    %v2532 = vpop.f32.mrf.mxu0
    %2533 = vmatprep.mubr.bf16.mxu0 %v2329
    %2534 = vmatmul.mubr.bf16.gmra.mxu0 %v2328
    %v2535 = vpop.f32.mrf.mxu0
    %v2536 = vadd.f32 %v2395, %v2535
    %v2537 = vpop.f32.mrf.mxu0
    %v2538 = vpop.f32.mrf.mxu0
    %v2539 = vadd.f32 %v2395, %v2538
    %v2540 = vpop.f32.mrf.mxu0
    %2541 = vmatprep.mubr.bf16.mxu0 %v2331
    %2542 = vmatmul.mubr.bf16.gmra.mxu0 %v2330
    %v2543 = vpop.f32.mrf.mxu0
    %v2544 = vadd.f32 %v2395, %v2543
    %v2545 = vpop.f32.mrf.mxu0
    %v2546 = vpop.f32.mrf.mxu0
    %v2547 = vadd.f32 %v2395, %v2546
    %v2548 = vpop.f32.mrf.mxu0
    %2549 = vmatprep.mubr.bf16.mxu0 %v2333
    %2550 = vmatmul.mubr.bf16.gmra.mxu0 %v2332
    %v2551 = vpop.f32.mrf.mxu0
    %v2552 = vadd.f32 %v2395, %v2551
    %v2553 = vpop.f32.mrf.mxu0
    %v2554 = vpop.f32.mrf.mxu0
    %v2555 = vadd.f32 %v2395, %v2554
    %v2556 = vpop.f32.mrf.mxu0
    %2557 = vmatprep.mubr.bf16.mxu0 %v2335
    %2558 = vmatmul.mubr.bf16.gmra.mxu0 %v2334
    %v2559 = vpop.f32.mrf.mxu0
    %v2560 = vadd.f32 %v2395, %v2559
    %v2561 = vpop.f32.mrf.mxu0
    %v2562 = vpop.f32.mrf.mxu0
    %v2563 = vadd.f32 %v2395, %v2562
    %v2564 = vpop.f32.mrf.mxu0
    %2565 = vmatprep.mubr.bf16.mxu0 %v2337
    %2566 = vmatmul.mubr.bf16.gmra.mxu0 %v2336
    %v2567 = vpop.f32.mrf.mxu0
    %v2568 = vadd.f32 %v2395, %v2567
    %v2569 = vpop.f32.mrf.mxu0
    %v2570 = vpop.f32.mrf.mxu0
    %v2571 = vadd.f32 %v2395, %v2570
    %v2572 = vpop.f32.mrf.mxu0
    %2573 = vmatprep.mubr.bf16.mxu0 %v2339
    %2574 = vmatmul.mubr.bf16.gmra.mxu0 %v2338
    %v2575 = vpop.f32.mrf.mxu0
    %v2576 = vadd.f32 %v2395, %v2575
    %v2577 = vpop.f32.mrf.mxu0
    %v2578 = vpop.f32.mrf.mxu0
    %v2579 = vadd.f32 %v2395, %v2578
    %v2580 = vpop.f32.mrf.mxu0
    %2581 = vmatprep.mubr.bf16.mxu0 %v2341
    %2582 = vmatmul.mubr.bf16.gmra.mxu0 %v2340
    %v2583 = vpop.f32.mrf.mxu0
    %v2584 = vadd.f32 %v2395, %v2583
    %v2585 = vpop.f32.mrf.mxu0
    %v2586 = vpop.f32.mrf.mxu0
    %v2587 = vadd.f32 %v2395, %v2586
    %v2588 = vpop.f32.mrf.mxu0
    %2589 = vmatprep.mubr.bf16.mxu0 %v2343
    %2590 = vmatmul.mubr.bf16.gmra.mxu0 %v2342
    %v2591 = vpop.f32.mrf.mxu0
    %v2592 = vadd.f32 %v2395, %v2591
    %v2593 = vpop.f32.mrf.mxu0
    %v2594 = vpop.f32.mrf.mxu0
    %v2595 = vadd.f32 %v2395, %v2594
    %v2596 = vpop.f32.mrf.mxu0
    %2597 = vmatprep.mubr.bf16.mxu0 %v2345
    %2598 = vmatmul.mubr.bf16.gmra.mxu0 %v2344
    %v2599 = vpop.f32.mrf.mxu0
    %v2600 = vadd.f32 %v2395, %v2599
    %v2601 = vpop.f32.mrf.mxu0
    %v2602 = vpop.f32.mrf.mxu0
    %v2603 = vadd.f32 %v2395, %v2602
    %v2604 = vpop.f32.mrf.mxu0
    %2605 = vmatprep.mubr.bf16.mxu0 %v2347
    %2606 = vmatmul.mubr.bf16.gmra.mxu0 %v2346
    %v2607 = vpop.f32.mrf.mxu0
    %v2608 = vadd.f32 %v2395, %v2607
    %v2609 = vpop.f32.mrf.mxu0
    %v2610 = vpop.f32.mrf.mxu0
    %v2611 = vadd.f32 %v2395, %v2610
    %v2612 = vpop.f32.mrf.mxu0
    %2613 = vmatprep.mubr.bf16.mxu0 %v2349
    %2614 = vmatmul.mubr.bf16.gmra.mxu0 %v2348
    %v2615 = vpop.f32.mrf.mxu0
    %v2616 = vadd.f32 %v2395, %v2615
    %v2617 = vpop.f32.mrf.mxu0
    %v2618 = vpop.f32.mrf.mxu0
    %v2619 = vadd.f32 %v2395, %v2618
    %v2620 = vpop.f32.mrf.mxu0
    %2621 = vmatprep.mubr.bf16.mxu0 %v2351
    %2622 = vmatmul.mubr.bf16.gmra.mxu0 %v2350
    %v2623 = vpop.f32.mrf.mxu0
    %v2624 = vadd.f32 %v2395, %v2623
    %v2625 = vpop.f32.mrf.mxu0
    %v2626 = vpop.f32.mrf.mxu0
    %v2627 = vadd.f32 %v2395, %v2626
    %v2628 = vpop.f32.mrf.mxu0
    %2629 = vmatprep.mubr.bf16.mxu0 %v2353
    %2630 = vmatmul.mubr.bf16.gmra.mxu0 %v2352
    %v2631 = vpop.f32.mrf.mxu0
    %v2632 = vadd.f32 %v2395, %v2631
    %v2633 = vpop.f32.mrf.mxu0
    %v2634 = vpop.f32.mrf.mxu0
    %v2635 = vadd.f32 %v2395, %v2634
    %v2636 = vpop.f32.mrf.mxu0
    %2637 = vmatprep.mubr.bf16.mxu0 %v2355
    %2638 = vmatmul.mubr.bf16.gmra.mxu0 %v2354
    %v2639 = vpop.f32.mrf.mxu0
    %v2640 = vadd.f32 %v2395, %v2639
    %v2641 = vpop.f32.mrf.mxu0
    %v2642 = vpop.f32.mrf.mxu0
    %v2643 = vadd.f32 %v2395, %v2642
    %v2644 = vpop.f32.mrf.mxu0
    %2645 = vmatprep.mubr.bf16.mxu0 %v2357
    %2646 = vmatmul.mubr.bf16.gmra.mxu0 %v2356
    %v2647 = vpop.f32.mrf.mxu0
    %v2648 = vadd.f32 %v2395, %v2647
    %v2649 = vpop.f32.mrf.mxu0
    %v2650 = vpop.f32.mrf.mxu0
    %v2651 = vadd.f32 %v2395, %v2650
    %v2652 = vpop.f32.mrf.mxu0
    %2653 = vdwg.mxu0
    %v2654 = vmax.f32 %v2528, 0.0
    %v2655 = vmax.f32 %v2531, 0.0
    %v2656 = vmax.f32 %v2536, 0.0
    %v2657 = vmax.f32 %v2539, 0.0
    %v2658 = vmax.f32 %v2544, 0.0
    %v2659 = vmax.f32 %v2547, 0.0
    %v2660 = vmax.f32 %v2552, 0.0
    %v2661 = vmax.f32 %v2555, 0.0
    %v2662 = vmax.f32 %v2560, 0.0
    %v2663 = vmax.f32 %v2563, 0.0
    %v2664 = vmax.f32 %v2568, 0.0
    %v2665 = vmax.f32 %v2571, 0.0
    %v2666 = vmax.f32 %v2576, 0.0
    %v2667 = vmax.f32 %v2579, 0.0
    %v2668 = vmax.f32 %v2584, 0.0
    %v2669 = vmax.f32 %v2587, 0.0
    %v2670 = vmax.f32 %v2592, 0.0
    %v2671 = vmax.f32 %v2595, 0.0
    %v2672 = vmax.f32 %v2600, 0.0
    %v2673 = vmax.f32 %v2603, 0.0
    %v2674 = vmax.f32 %v2608, 0.0
    %v2675 = vmax.f32 %v2611, 0.0
    %v2676 = vmax.f32 %v2616, 0.0
    %v2677 = vmax.f32 %v2619, 0.0
    %v2678 = vmax.f32 %v2624, 0.0
    %v2679 = vmax.f32 %v2627, 0.0
    %v2680 = vmax.f32 %v2632, 0.0
    %v2681 = vmax.f32 %v2635, 0.0
    %v2682 = vmax.f32 %v2640, 0.0
    %v2683 = vmax.f32 %v2643, 0.0
    %v2684 = vmax.f32 %v2648, 0.0
    %v2685 = vmax.f32 %v2651, 0.0
    %v2686 = vpack.c.bf16 %v2655, %v2654
    %v2687 = vpack.c.bf16 %v2657, %v2656
    %v2688 = vpack.c.bf16 %v2659, %v2658
    %v2689 = vpack.c.bf16 %v2661, %v2660
    %v2690 = vpack.c.bf16 %v2663, %v2662
    %v2691 = vpack.c.bf16 %v2665, %v2664
    %v2692 = vpack.c.bf16 %v2667, %v2666
    %v2693 = vpack.c.bf16 %v2669, %v2668
    %v2694 = vpack.c.bf16 %v2671, %v2670
    %v2695 = vpack.c.bf16 %v2673, %v2672
    %v2696 = vpack.c.bf16 %v2675, %v2674
    %v2697 = vpack.c.bf16 %v2677, %v2676
    %v2698 = vpack.c.bf16 %v2679, %v2678
    %v2699 = vpack.c.bf16 %v2681, %v2680
    %v2700 = vpack.c.bf16 %v2683, %v2682
    %v2701 = vpack.c.bf16 %v2685, %v2684
    %v2702 = vld [vmem:[#allocation8] sm:$0xf]
    %v2703 = vld [vmem:[#allocation8 + $0x4] sm:$0xf]
    %v2704 = vld [vmem:[#allocation8 + $0x8] sm:$0xf]
    %v2705 = vld [vmem:[#allocation8 + $0xc] sm:$0xf]
    %v2706 = vld [vmem:[#allocation8 + $0x10] sm:$0xf]
    %v2707 = vld [vmem:[#allocation8 + $0x14] sm:$0xf]
    %v2708 = vld [vmem:[#allocation8 + $0x18] sm:$0xf]
    %v2709 = vld [vmem:[#allocation8 + $0x1c] sm:$0xf]
    %v2710 = vld [vmem:[#allocation8 + $0x20] sm:$0xf]
    %v2711 = vld [vmem:[#allocation8 + $0x24] sm:$0xf]
    %v2712 = vld [vmem:[#allocation8 + $0x28] sm:$0xf]
    %v2713 = vld [vmem:[#allocation8 + $0x2c] sm:$0xf]
    %v2714 = vld [vmem:[#allocation8 + $0x30] sm:$0xf]
    %v2715 = vld [vmem:[#allocation8 + $0x34] sm:$0xf]
    %v2716 = vld [vmem:[#allocation8 + $0x38] sm:$0xf]
    %v2717 = vld [vmem:[#allocation8 + $0x3c] sm:$0xf]
    %v2718 = vld [vmem:[%s6] sm:$0x1]
    %v2720 = vlaneseq
    %v2721 = vshrl.u32 %v2720, 7
    %v2722 = vsub.s32 0, %v2721
    %v2723 = vrot.slane %v2718, %v2722
    %v2741 = vunpack.c.l.b16 %v2702
    %v2742 = vunpack.c.l.b16 %v2703
    %v2743 = vunpack.c.l.b16 %v2704
    %v2744 = vunpack.c.l.b16 %v2705
    %v2745 = vunpack.c.l.b16 %v2706
    %v2746 = vunpack.c.l.b16 %v2707
    %v2747 = vunpack.c.l.b16 %v2708
    %v2748 = vunpack.c.l.b16 %v2709
    %v2749 = vunpack.c.l.b16 %v2710
    %v2750 = vunpack.c.l.b16 %v2711
    %v2751 = vunpack.c.l.b16 %v2712
    %v2752 = vunpack.c.l.b16 %v2713
    %v2753 = vunpack.c.l.b16 %v2714
    %v2754 = vunpack.c.l.b16 %v2715
    %v2755 = vunpack.c.l.b16 %v2716
    %v2756 = vunpack.c.l.b16 %v2717
    %v2757 = vpack.c.b16 %v2742, %v2741
    %v2758 = vpack.c.b16 %v2744, %v2743
    %v2759 = vpack.c.b16 %v2746, %v2745
    %v2760 = vpack.c.b16 %v2748, %v2747
    %v2761 = vpack.c.b16 %v2750, %v2749
    %v2762 = vpack.c.b16 %v2752, %v2751
    %v2763 = vpack.c.b16 %v2754, %v2753
    %v2764 = vpack.c.b16 %v2756, %v2755
    %2773 = vmatprep.subr.bf16.mxu0 0
    %2774 = vmatpush1.bf16.msra.mxu0 %v2764
    %2775 = vmatprep.subr.bf16.mxu0 0
    %2776 = vmatpush1.bf16.msra.mxu0 %v2763
    %2777 = vmatprep.subr.bf16.mxu0 0
    %2778 = vmatpush1.bf16.msra.mxu0 %v2762
    %2779 = vmatprep.subr.bf16.mxu0 0
    %2780 = vmatpush1.bf16.msra.mxu0 %v2761
    %2781 = vmatprep.subr.bf16.mxu0 0
    %2782 = vmatpush1.bf16.msra.mxu0 %v2760
    %2783 = vmatprep.subr.bf16.mxu0 0
    %2784 = vmatpush1.bf16.msra.mxu0 %v2759
    %2785 = vmatprep.subr.bf16.mxu0 0
    %2786 = vmatpush1.bf16.msra.mxu0 %v2758
    %2787 = vmatprep.subr.bf16.mxu0 0
    %2788 = vmatpush1.bf16.msra.mxu0 %v2757
    %2789 = vmatprep.subr.bf16.mxu0 0
    %2790 = vmatpush2.bf16.msra.mxu0 0
    %2791 = vmatprep.subr.bf16.mxu0 0
    %2792 = vmatpush2.bf16.msra.mxu0 0
    %2793 = vmatprep.subr.bf16.mxu0 0
    %2794 = vmatpush2.bf16.msra.mxu0 0
    %2795 = vmatprep.subr.bf16.mxu0 0
    %2796 = vmatpush2.bf16.msra.mxu0 0
    %2797 = vmatprep.subr.bf16.mxu0 0
    %2798 = vmatpush2.bf16.msra.mxu0 0
    %2799 = vmatprep.subr.bf16.mxu0 0
    %2800 = vmatpush2.bf16.msra.mxu0 0
    %2801 = vmatprep.subr.bf16.mxu0 0
    %2802 = vmatpush2.bf16.msra.mxu0 0
    %2803 = vmatprep.subr.bf16.mxu0 0
    %2804 = vmatpush2.bf16.msra.mxu0 0
    %2805 = vmatprep.mubr.bf16.mxu0 0
    %2806 = vmatmul.mubr.bf16.gmra.mxu0 %v2686
    %v2807 = vpop.f32.mrf.mxu0
    %v2808 = vadd.f32 %v2723, %v2807
    %v2809 = vpop.f32.mrf.mxu0
    %v2810 = vpop.f32.mrf.mxu0
    %v2811 = vadd.f32 %v2723, %v2810
    %v2812 = vpop.f32.mrf.mxu0
    %2813 = vmatprep.mubr.bf16.mxu0 0
    %2814 = vmatmul.mubr.bf16.gmra.mxu0 %v2687
    %v2815 = vpop.f32.mrf.mxu0
    %v2816 = vadd.f32 %v2723, %v2815
    %v2817 = vpop.f32.mrf.mxu0
    %v2818 = vpop.f32.mrf.mxu0
    %v2819 = vadd.f32 %v2723, %v2818
    %v2820 = vpop.f32.mrf.mxu0
    %2821 = vmatprep.mubr.bf16.mxu0 0
    %2822 = vmatmul.mubr.bf16.gmra.mxu0 %v2688
    %v2823 = vpop.f32.mrf.mxu0
    %v2824 = vadd.f32 %v2723, %v2823
    %v2825 = vpop.f32.mrf.mxu0
    %v2826 = vpop.f32.mrf.mxu0
    %v2827 = vadd.f32 %v2723, %v2826
    %v2828 = vpop.f32.mrf.mxu0
    %2829 = vmatprep.mubr.bf16.mxu0 0
    %2830 = vmatmul.mubr.bf16.gmra.mxu0 %v2689
    %v2831 = vpop.f32.mrf.mxu0
    %v2832 = vadd.f32 %v2723, %v2831
    %v2833 = vpop.f32.mrf.mxu0
    %v2834 = vpop.f32.mrf.mxu0
    %v2835 = vadd.f32 %v2723, %v2834
    %v2836 = vpop.f32.mrf.mxu0
    %2837 = vmatprep.mubr.bf16.mxu0 0
    %2838 = vmatmul.mubr.bf16.gmra.mxu0 %v2690
    %v2839 = vpop.f32.mrf.mxu0
    %v2840 = vadd.f32 %v2723, %v2839
    %v2841 = vpop.f32.mrf.mxu0
    %v2842 = vpop.f32.mrf.mxu0
    %v2843 = vadd.f32 %v2723, %v2842
    %v2844 = vpop.f32.mrf.mxu0
    %2845 = vmatprep.mubr.bf16.mxu0 0
    %2846 = vmatmul.mubr.bf16.gmra.mxu0 %v2691
    %v2847 = vpop.f32.mrf.mxu0
    %v2848 = vadd.f32 %v2723, %v2847
    %v2849 = vpop.f32.mrf.mxu0
    %v2850 = vpop.f32.mrf.mxu0
    %v2851 = vadd.f32 %v2723, %v2850
    %v2852 = vpop.f32.mrf.mxu0
    %2853 = vmatprep.mubr.bf16.mxu0 0
    %2854 = vmatmul.mubr.bf16.gmra.mxu0 %v2692
    %v2855 = vpop.f32.mrf.mxu0
    %v2856 = vadd.f32 %v2723, %v2855
    %v2857 = vpop.f32.mrf.mxu0
    %v2858 = vpop.f32.mrf.mxu0
    %v2859 = vadd.f32 %v2723, %v2858
    %v2860 = vpop.f32.mrf.mxu0
    %2861 = vmatprep.mubr.bf16.mxu0 0
    %2862 = vmatmul.mubr.bf16.gmra.mxu0 %v2693
    %v2863 = vpop.f32.mrf.mxu0
    %v2864 = vadd.f32 %v2723, %v2863
    %v2865 = vpop.f32.mrf.mxu0
    %v2866 = vpop.f32.mrf.mxu0
    %v2867 = vadd.f32 %v2723, %v2866
    %v2868 = vpop.f32.mrf.mxu0
    %2869 = vmatprep.mubr.bf16.mxu0 0
    %2870 = vmatmul.mubr.bf16.gmra.mxu0 %v2694
    %v2871 = vpop.f32.mrf.mxu0
    %v2872 = vadd.f32 %v2723, %v2871
    %v2873 = vpop.f32.mrf.mxu0
    %v2874 = vpop.f32.mrf.mxu0
    %v2875 = vadd.f32 %v2723, %v2874
    %v2876 = vpop.f32.mrf.mxu0
    %2877 = vmatprep.mubr.bf16.mxu0 0
    %2878 = vmatmul.mubr.bf16.gmra.mxu0 %v2695
    %v2879 = vpop.f32.mrf.mxu0
    %v2880 = vadd.f32 %v2723, %v2879
    %v2881 = vpop.f32.mrf.mxu0
    %v2882 = vpop.f32.mrf.mxu0
    %v2883 = vadd.f32 %v2723, %v2882
    %v2884 = vpop.f32.mrf.mxu0
    %2885 = vmatprep.mubr.bf16.mxu0 0
    %2886 = vmatmul.mubr.bf16.gmra.mxu0 %v2696
    %v2887 = vpop.f32.mrf.mxu0
    %v2888 = vadd.f32 %v2723, %v2887
    %v2889 = vpop.f32.mrf.mxu0
    %v2890 = vpop.f32.mrf.mxu0
    %v2891 = vadd.f32 %v2723, %v2890
    %v2892 = vpop.f32.mrf.mxu0
    %2893 = vmatprep.mubr.bf16.mxu0 0
    %2894 = vmatmul.mubr.bf16.gmra.mxu0 %v2697
    %v2895 = vpop.f32.mrf.mxu0
    %v2896 = vadd.f32 %v2723, %v2895
    %v2897 = vpop.f32.mrf.mxu0
    %v2898 = vpop.f32.mrf.mxu0
    %v2899 = vadd.f32 %v2723, %v2898
    %v2900 = vpop.f32.mrf.mxu0
    %2901 = vmatprep.mubr.bf16.mxu0 0
    %2902 = vmatmul.mubr.bf16.gmra.mxu0 %v2698
    %v2903 = vpop.f32.mrf.mxu0
    %v2904 = vadd.f32 %v2723, %v2903
    %v2905 = vpop.f32.mrf.mxu0
    %v2906 = vpop.f32.mrf.mxu0
    %v2907 = vadd.f32 %v2723, %v2906
    %v2908 = vpop.f32.mrf.mxu0
    %2909 = vmatprep.mubr.bf16.mxu0 0
    %2910 = vmatmul.mubr.bf16.gmra.mxu0 %v2699
    %v2911 = vpop.f32.mrf.mxu0
    %v2912 = vadd.f32 %v2723, %v2911
    %v2913 = vpop.f32.mrf.mxu0
    %v2914 = vpop.f32.mrf.mxu0
    %v2915 = vadd.f32 %v2723, %v2914
    %v2916 = vpop.f32.mrf.mxu0
    %2917 = vmatprep.mubr.bf16.mxu0 0
    %2918 = vmatmul.mubr.bf16.gmra.mxu0 %v2700
    %v2919 = vpop.f32.mrf.mxu0
    %v2920 = vadd.f32 %v2723, %v2919
    %v2921 = vpop.f32.mrf.mxu0
    %v2922 = vpop.f32.mrf.mxu0
    %v2923 = vadd.f32 %v2723, %v2922
    %v2924 = vpop.f32.mrf.mxu0
    %2925 = vmatprep.mubr.bf16.mxu0 0
    %2926 = vmatmul.mubr.bf16.gmra.mxu0 %v2701
    %v2927 = vpop.f32.mrf.mxu0
    %v2928 = vadd.f32 %v2723, %v2927
    %v2929 = vpop.f32.mrf.mxu0
    %v2930 = vpop.f32.mrf.mxu0
    %v2931 = vadd.f32 %v2723, %v2930
    %v2932 = vpop.f32.mrf.mxu0
    %2933 = vdwg.mxu0
    %v2934 = vmax.f32 %v2808, 0.0
    %v2935 = vmax.f32 %v2811, 0.0
    %v2936 = vmax.f32 %v2816, 0.0
    %v2937 = vmax.f32 %v2819, 0.0
    %v2938 = vmax.f32 %v2824, 0.0
    %v2939 = vmax.f32 %v2827, 0.0
    %v2940 = vmax.f32 %v2832, 0.0
    %v2941 = vmax.f32 %v2835, 0.0
    %v2942 = vmax.f32 %v2840, 0.0
    %v2943 = vmax.f32 %v2843, 0.0
    %v2944 = vmax.f32 %v2848, 0.0
    %v2945 = vmax.f32 %v2851, 0.0
    %v2946 = vmax.f32 %v2856, 0.0
    %v2947 = vmax.f32 %v2859, 0.0
    %v2948 = vmax.f32 %v2864, 0.0
    %v2949 = vmax.f32 %v2867, 0.0
    %v2950 = vmax.f32 %v2872, 0.0
    %v2951 = vmax.f32 %v2875, 0.0
    %v2952 = vmax.f32 %v2880, 0.0
    %v2953 = vmax.f32 %v2883, 0.0
    %v2954 = vmax.f32 %v2888, 0.0
    %v2955 = vmax.f32 %v2891, 0.0
    %v2956 = vmax.f32 %v2896, 0.0
    %v2957 = vmax.f32 %v2899, 0.0
    %v2958 = vmax.f32 %v2904, 0.0
    %v2959 = vmax.f32 %v2907, 0.0
    %v2960 = vmax.f32 %v2912, 0.0
    %v2961 = vmax.f32 %v2915, 0.0
    %v2962 = vmax.f32 %v2920, 0.0
    %v2963 = vmax.f32 %v2923, 0.0
    %v2964 = vmax.f32 %v2928, 0.0
    %v2965 = vmax.f32 %v2931, 0.0
    %v2966 = vpack.c.bf16 %v2935, %v2934
    %v2967 = vpack.c.bf16 %v2937, %v2936
    %v2968 = vpack.c.bf16 %v2939, %v2938
    %v2969 = vpack.c.bf16 %v2941, %v2940
    %v2970 = vpack.c.bf16 %v2943, %v2942
    %v2971 = vpack.c.bf16 %v2945, %v2944
    %v2972 = vpack.c.bf16 %v2947, %v2946
    %v2973 = vpack.c.bf16 %v2949, %v2948
    %v2974 = vpack.c.bf16 %v2951, %v2950
    %v2975 = vpack.c.bf16 %v2953, %v2952
    %v2976 = vpack.c.bf16 %v2955, %v2954
    %v2977 = vpack.c.bf16 %v2957, %v2956
    %v2978 = vpack.c.bf16 %v2959, %v2958
    %v2979 = vpack.c.bf16 %v2961, %v2960
    %v2980 = vpack.c.bf16 %v2963, %v2962
    %v2981 = vpack.c.bf16 %v2965, %v2964
    %v2982 = vld [vmem:[#allocation10] sm:$0xf]
    %v2983 = vld [vmem:[#allocation10 + $0x4] sm:$0xf]
    %v2984 = vld [vmem:[#allocation10 + $0x8] sm:$0xf]
    %v2985 = vld [vmem:[#allocation10 + $0xc] sm:$0xf]
    %v2986 = vld [vmem:[#allocation10 + $0x10] sm:$0xf]
    %v2987 = vld [vmem:[#allocation10 + $0x14] sm:$0xf]
    %v2988 = vld [vmem:[#allocation10 + $0x18] sm:$0xf]
    %v2989 = vld [vmem:[#allocation10 + $0x1c] sm:$0xf]
    %v2990 = vld [vmem:[#allocation10 + $0x20] sm:$0xf]
    %v2991 = vld [vmem:[#allocation10 + $0x24] sm:$0xf]
    %v2992 = vld [vmem:[#allocation10 + $0x28] sm:$0xf]
    %v2993 = vld [vmem:[#allocation10 + $0x2c] sm:$0xf]
    %v2994 = vld [vmem:[#allocation10 + $0x30] sm:$0xf]
    %v2995 = vld [vmem:[#allocation10 + $0x34] sm:$0xf]
    %v2996 = vld [vmem:[#allocation10 + $0x38] sm:$0xf]
    %v2997 = vld [vmem:[#allocation10 + $0x3c] sm:$0xf]
    %v2998 = vld [vmem:[%s8] sm:$0x1]
    %v3000 = vlaneseq
    %v3001 = vshrl.u32 %v3000, 7
    %v3002 = vsub.s32 0, %v3001
    %v3003 = vrot.slane %v2998, %v3002
    %v3021 = vunpack.c.l.b16 %v2982
    %v3022 = vunpack.c.l.b16 %v2983
    %v3023 = vunpack.c.l.b16 %v2984
    %v3024 = vunpack.c.l.b16 %v2985
    %v3025 = vunpack.c.l.b16 %v2986
    %v3026 = vunpack.c.l.b16 %v2987
    %v3027 = vunpack.c.l.b16 %v2988
    %v3028 = vunpack.c.l.b16 %v2989
    %v3029 = vunpack.c.l.b16 %v2990
    %v3030 = vunpack.c.l.b16 %v2991
    %v3031 = vunpack.c.l.b16 %v2992
    %v3032 = vunpack.c.l.b16 %v2993
    %v3033 = vunpack.c.l.b16 %v2994
    %v3034 = vunpack.c.l.b16 %v2995
    %v3035 = vunpack.c.l.b16 %v2996
    %v3036 = vunpack.c.l.b16 %v2997
    %v3037 = vpack.c.b16 %v3022, %v3021
    %v3038 = vpack.c.b16 %v3024, %v3023
    %v3039 = vpack.c.b16 %v3026, %v3025
    %v3040 = vpack.c.b16 %v3028, %v3027
    %v3041 = vpack.c.b16 %v3030, %v3029
    %v3042 = vpack.c.b16 %v3032, %v3031
    %v3043 = vpack.c.b16 %v3034, %v3033
    %v3044 = vpack.c.b16 %v3036, %v3035
    %3053 = vmatprep.subr.bf16.mxu0 0
    %3054 = vmatpush1.bf16.msra.mxu0 %v3044
    %3055 = vmatprep.subr.bf16.mxu0 0
    %3056 = vmatpush1.bf16.msra.mxu0 %v3043
    %3057 = vmatprep.subr.bf16.mxu0 0
    %3058 = vmatpush1.bf16.msra.mxu0 %v3042
    %3059 = vmatprep.subr.bf16.mxu0 0
    %3060 = vmatpush1.bf16.msra.mxu0 %v3041
    %3061 = vmatprep.subr.bf16.mxu0 0
    %3062 = vmatpush1.bf16.msra.mxu0 %v3040
    %3063 = vmatprep.subr.bf16.mxu0 0
    %3064 = vmatpush1.bf16.msra.mxu0 %v3039
    %3065 = vmatprep.subr.bf16.mxu0 0
    %3066 = vmatpush1.bf16.msra.mxu0 %v3038
    %3067 = vmatprep.subr.bf16.mxu0 0
    %3068 = vmatpush1.bf16.msra.mxu0 %v3037
    %3069 = vmatprep.subr.bf16.mxu0 0
    %3070 = vmatpush2.bf16.msra.mxu0 0
    %3071 = vmatprep.subr.bf16.mxu0 0
    %3072 = vmatpush2.bf16.msra.mxu0 0
    %3073 = vmatprep.subr.bf16.mxu0 0
    %3074 = vmatpush2.bf16.msra.mxu0 0
    %3075 = vmatprep.subr.bf16.mxu0 0
    %3076 = vmatpush2.bf16.msra.mxu0 0
    %3077 = vmatprep.subr.bf16.mxu0 0
    %3078 = vmatpush2.bf16.msra.mxu0 0
    %3079 = vmatprep.subr.bf16.mxu0 0
    %3080 = vmatpush2.bf16.msra.mxu0 0
    %3081 = vmatprep.subr.bf16.mxu0 0
    %3082 = vmatpush2.bf16.msra.mxu0 0
    %3083 = vmatprep.subr.bf16.mxu0 0
    %3084 = vmatpush2.bf16.msra.mxu0 0
    %3085 = vmatprep.mubr.bf16.mxu0 0
    %3086 = vmatmul.mubr.bf16.gmra.mxu0 %v2966
    %v3087 = vpop.f32.mrf.mxu0
    %v3088 = vadd.f32 %v3003, %v3087
    %v3089 = vpop.f32.mrf.mxu0
    %v3090 = vpop.f32.mrf.mxu0
    %v3091 = vadd.f32 %v3003, %v3090
    %v3092 = vpop.f32.mrf.mxu0
    %3093 = vmatprep.mubr.bf16.mxu0 0
    %3094 = vmatmul.mubr.bf16.gmra.mxu0 %v2967
    %v3095 = vpop.f32.mrf.mxu0
    %v3096 = vadd.f32 %v3003, %v3095
    %v3097 = vpop.f32.mrf.mxu0
    %v3098 = vpop.f32.mrf.mxu0
    %v3099 = vadd.f32 %v3003, %v3098
    %v3100 = vpop.f32.mrf.mxu0
    %3101 = vmatprep.mubr.bf16.mxu0 0
    %3102 = vmatmul.mubr.bf16.gmra.mxu0 %v2968
    %v3103 = vpop.f32.mrf.mxu0
    %v3104 = vadd.f32 %v3003, %v3103
    %v3105 = vpop.f32.mrf.mxu0
    %v3106 = vpop.f32.mrf.mxu0
    %v3107 = vadd.f32 %v3003, %v3106
    %v3108 = vpop.f32.mrf.mxu0
    %3109 = vmatprep.mubr.bf16.mxu0 0
    %3110 = vmatmul.mubr.bf16.gmra.mxu0 %v2969
    %v3111 = vpop.f32.mrf.mxu0
    %v3112 = vadd.f32 %v3003, %v3111
    %v3113 = vpop.f32.mrf.mxu0
    %v3114 = vpop.f32.mrf.mxu0
    %v3115 = vadd.f32 %v3003, %v3114
    %v3116 = vpop.f32.mrf.mxu0
    %3117 = vmatprep.mubr.bf16.mxu0 0
    %3118 = vmatmul.mubr.bf16.gmra.mxu0 %v2970
    %v3119 = vpop.f32.mrf.mxu0
    %v3120 = vadd.f32 %v3003, %v3119
    %v3121 = vpop.f32.mrf.mxu0
    %v3122 = vpop.f32.mrf.mxu0
    %v3123 = vadd.f32 %v3003, %v3122
    %v3124 = vpop.f32.mrf.mxu0
    %3125 = vmatprep.mubr.bf16.mxu0 0
    %3126 = vmatmul.mubr.bf16.gmra.mxu0 %v2971
    %v3127 = vpop.f32.mrf.mxu0
    %v3128 = vadd.f32 %v3003, %v3127
    %v3129 = vpop.f32.mrf.mxu0
    %v3130 = vpop.f32.mrf.mxu0
    %v3131 = vadd.f32 %v3003, %v3130
    %v3132 = vpop.f32.mrf.mxu0
    %3133 = vmatprep.mubr.bf16.mxu0 0
    %3134 = vmatmul.mubr.bf16.gmra.mxu0 %v2972
    %v3135 = vpop.f32.mrf.mxu0
    %v3136 = vadd.f32 %v3003, %v3135
    %v3137 = vpop.f32.mrf.mxu0
    %v3138 = vpop.f32.mrf.mxu0
    %v3139 = vadd.f32 %v3003, %v3138
    %v3140 = vpop.f32.mrf.mxu0
    %3141 = vmatprep.mubr.bf16.mxu0 0
    %3142 = vmatmul.mubr.bf16.gmra.mxu0 %v2973
    %v3143 = vpop.f32.mrf.mxu0
    %v3144 = vadd.f32 %v3003, %v3143
    %v3145 = vpop.f32.mrf.mxu0
    %v3146 = vpop.f32.mrf.mxu0
    %v3147 = vadd.f32 %v3003, %v3146
    %v3148 = vpop.f32.mrf.mxu0
    %3149 = vmatprep.mubr.bf16.mxu0 0
    %3150 = vmatmul.mubr.bf16.gmra.mxu0 %v2974
    %v3151 = vpop.f32.mrf.mxu0
    %v3152 = vadd.f32 %v3003, %v3151
    %v3153 = vpop.f32.mrf.mxu0
    %v3154 = vpop.f32.mrf.mxu0
    %v3155 = vadd.f32 %v3003, %v3154
    %v3156 = vpop.f32.mrf.mxu0
    %3157 = vmatprep.mubr.bf16.mxu0 0
    %3158 = vmatmul.mubr.bf16.gmra.mxu0 %v2975
    %v3159 = vpop.f32.mrf.mxu0
    %v3160 = vadd.f32 %v3003, %v3159
    %v3161 = vpop.f32.mrf.mxu0
    %v3162 = vpop.f32.mrf.mxu0
    %v3163 = vadd.f32 %v3003, %v3162
    %v3164 = vpop.f32.mrf.mxu0
    %3165 = vmatprep.mubr.bf16.mxu0 0
    %3166 = vmatmul.mubr.bf16.gmra.mxu0 %v2976
    %v3167 = vpop.f32.mrf.mxu0
    %v3168 = vadd.f32 %v3003, %v3167
    %v3169 = vpop.f32.mrf.mxu0
    %v3170 = vpop.f32.mrf.mxu0
    %v3171 = vadd.f32 %v3003, %v3170
    %v3172 = vpop.f32.mrf.mxu0
    %3173 = vmatprep.mubr.bf16.mxu0 0
    %3174 = vmatmul.mubr.bf16.gmra.mxu0 %v2977
    %v3175 = vpop.f32.mrf.mxu0
    %v3176 = vadd.f32 %v3003, %v3175
    %v3177 = vpop.f32.mrf.mxu0
    %v3178 = vpop.f32.mrf.mxu0
    %v3179 = vadd.f32 %v3003, %v3178
    %v3180 = vpop.f32.mrf.mxu0
    %3181 = vmatprep.mubr.bf16.mxu0 0
    %3182 = vmatmul.mubr.bf16.gmra.mxu0 %v2978
    %v3183 = vpop.f32.mrf.mxu0
    %v3184 = vadd.f32 %v3003, %v3183
    %v3185 = vpop.f32.mrf.mxu0
    %v3186 = vpop.f32.mrf.mxu0
    %v3187 = vadd.f32 %v3003, %v3186
    %v3188 = vpop.f32.mrf.mxu0
    %3189 = vmatprep.mubr.bf16.mxu0 0
    %3190 = vmatmul.mubr.bf16.gmra.mxu0 %v2979
    %v3191 = vpop.f32.mrf.mxu0
    %v3192 = vadd.f32 %v3003, %v3191
    %v3193 = vpop.f32.mrf.mxu0
    %v3194 = vpop.f32.mrf.mxu0
    %v3195 = vadd.f32 %v3003, %v3194
    %v3196 = vpop.f32.mrf.mxu0
    %3197 = vmatprep.mubr.bf16.mxu0 0
    %3198 = vmatmul.mubr.bf16.gmra.mxu0 %v2980
    %v3199 = vpop.f32.mrf.mxu0
    %v3200 = vadd.f32 %v3003, %v3199
    %v3201 = vpop.f32.mrf.mxu0
    %v3202 = vpop.f32.mrf.mxu0
    %v3203 = vadd.f32 %v3003, %v3202
    %v3204 = vpop.f32.mrf.mxu0
    %3205 = vmatprep.mubr.bf16.mxu0 0
    %3206 = vmatmul.mubr.bf16.gmra.mxu0 %v2981
    %v3207 = vpop.f32.mrf.mxu0
    %v3208 = vadd.f32 %v3003, %v3207
    %v3209 = vpop.f32.mrf.mxu0
    %v3210 = vpop.f32.mrf.mxu0
    %v3211 = vadd.f32 %v3003, %v3210
    %v3212 = vpop.f32.mrf.mxu0
    %3213 = vdwg.mxu0
    %3214 = vst [vmem:[#allocation11] sm:$0xff] %v3088
    %3215 = vst [vmem:[#allocation11 + $0x8] sm:$0xff] %v3091
    %3216 = vst [vmem:[#allocation11 + $0x10] sm:$0xff] %v3096
    %3217 = vst [vmem:[#allocation11 + $0x18] sm:$0xff] %v3099
    %3218 = vst [vmem:[#allocation11 + $0x20] sm:$0xff] %v3104
    %3219 = vst [vmem:[#allocation11 + $0x28] sm:$0xff] %v3107
    %3220 = vst [vmem:[#allocation11 + $0x30] sm:$0xff] %v3112
    %3221 = vst [vmem:[#allocation11 + $0x38] sm:$0xff] %v3115
    %3222 = vst [vmem:[#allocation11 + $0x40] sm:$0xff] %v3120
    %3223 = vst [vmem:[#allocation11 + $0x48] sm:$0xff] %v3123
    %3224 = vst [vmem:[#allocation11 + $0x50] sm:$0xff] %v3128
    %3225 = vst [vmem:[#allocation11 + $0x58] sm:$0xff] %v3131
    %3226 = vst [vmem:[#allocation11 + $0x60] sm:$0xff] %v3136
    %3227 = vst [vmem:[#allocation11 + $0x68] sm:$0xff] %v3139
    %3228 = vst [vmem:[#allocation11 + $0x70] sm:$0xff] %v3144
    %3229 = vst [vmem:[#allocation11 + $0x78] sm:$0xff] %v3147
    %3230 = vst [vmem:[#allocation11 + $0x80] sm:$0xff] %v3152
    %3231 = vst [vmem:[#allocation11 + $0x88] sm:$0xff] %v3155
    %3232 = vst [vmem:[#allocation11 + $0x90] sm:$0xff] %v3160
    %3233 = vst [vmem:[#allocation11 + $0x98] sm:$0xff] %v3163
    %3234 = vst [vmem:[#allocation11 + $0xa0] sm:$0xff] %v3168
    %3235 = vst [vmem:[#allocation11 + $0xa8] sm:$0xff] %v3171
    %3236 = vst [vmem:[#allocation11 + $0xb0] sm:$0xff] %v3176
    %3237 = vst [vmem:[#allocation11 + $0xb8] sm:$0xff] %v3179
    %3238 = vst [vmem:[#allocation11 + $0xc0] sm:$0xff] %v3184
    %3239 = vst [vmem:[#allocation11 + $0xc8] sm:$0xff] %v3187
    %3240 = vst [vmem:[#allocation11 + $0xd0] sm:$0xff] %v3192
    %3241 = vst [vmem:[#allocation11 + $0xd8] sm:$0xff] %v3195
    %3242 = vst [vmem:[#allocation11 + $0xe0] sm:$0xff] %v3200
    %3243 = vst [vmem:[#allocation11 + $0xe8] sm:$0xff] %v3203
    %3244 = vst [vmem:[#allocation11 + $0xf0] sm:$0xff] %v3208
    %3245 = vst [vmem:[#allocation11 + $0xf8] sm:$0xff] %v3211
    // Predicated region
    $region58: #{tpu_custom_call.1} parent=1 // pred_check
      _
    $region59: #{tpu_custom_call.1} parent=1 // pred_check_branch
      %3247 = sbr.rel (0) target = $region61
    $region60: #{tpu_custom_call.1} parent=1 // pred_region
      %s3249 = ssub.s32 4096, 4096
      %3250 = vsyncadd [#allocation4], %s3249
      %s3251 = sshll.u32 [#allocation11], 4
      %s3252 = int_to_ptr.vmem [resolvable:$true] %s3251
      %3257 = dma.vmem_to_hbm [thread:$0]  %s3252, 4096, %s9, [#allocation4], 128, 128, 8
    $region61: #{tpu_custom_call.1} parent=1 // pred_fallthru
      _
    // Predicated region
    $region62: #{tpu_custom_call.1} parent=1 // pred_check
      _
    $region63: #{tpu_custom_call.1} parent=1 // pred_check_branch
      %3259 = sbr.rel (0) target = $region65
    $region64: #{tpu_custom_call.1} parent=1 // pred_region
      %3260 = dma.done [#allocation4], 4096
    $region65: #{tpu_custom_call.1} parent=1 // pred_fallthru
      _
    %3261 = vsyncpa [#allocation3], 1
    %3262 = vsyncpa [#allocation6], 1
    %3263 = vsyncpa [#allocation9], 1
    %3264 = vsyncpa [#allocation4], 1

</llo_original>
